<compile_context>
chip_gen: v7x
topology: tpu7x:2x2x1
jax: 0.10.0
libtpu: 0.0.40
codegen_flags: <defaults>
</compile_context>

<pallas_src>
import jax
import jax.numpy as jnp
from jax.experimental import pallas as pl
from jax.experimental.pallas import tpu as pltpu

# ---------------- model hyper-parameters (small, consistent with module) ----
BATCH = 2
SRC_SEQ = 8
TGT_SEQ = 10          # forced by nn.Linear(10, 1) after Flatten
INPUT_DIM = 32
NUM_HEADS = 4
HEAD_DIM = INPUT_DIM // NUM_HEADS
MIDDLE_DIM = 64
NUM_LAYERS = 2
MAX_SEQ_LEN = 16
LN_EPS = 1e-5
LANE = 128


# ----------------------------- slab packing ----------------------------------
def _pack_slab(entries):
    """Pack a list of (name, 2-D f32 array) into one (rows, 128) slab.

    Each entry is zero-padded to 128 lanes and to a multiple of 8 rows so every
    entry starts at an 8-aligned sublane offset.  Returns (slab, offsets) with
    offsets[name] = (row_offset, rows, cols).
    """
    offsets = {}
    blocks = []
    off = 0
    for name, a in entries:
        a = jnp.asarray(a, jnp.float32)
        r, c = a.shape
        offsets[name] = (off, r, c)
        pad_r = (-r) % 8
        blocks.append(jnp.pad(a, ((0, pad_r), (0, LANE - c))))
        off += r + pad_r
    return jnp.concatenate(blocks, axis=0), offsets


# ----------------------------- fused kernel ----------------------------------
def _make_kernel(moff, voff):
    dh = HEAD_DIM
    scale = 1.0 / (dh ** 0.5)

    def kernel(mats_ref, vecs_ref, src_ref, tgt_ref, out_ref):
        def M(name):                       # static slice into the matrix slab
            o, r, c = moff[name]
            return mats_ref[o:o + r, 0:c]

        def V(name):                       # static slice into the vector slab
            o, r, c = voff[name]
            return vecs_ref[o:o + r, 0:c]

        def dot(a, b):
            return jnp.dot(a, b, preferred_element_type=jnp.float32)

        def attn(q, k, v, mask_name):
            # scores over the batch-stacked rows; block-diagonal additive mask
            # (0 / -1e9) makes it exactly equal to per-batch attention.
            s = jax.lax.dot_general(
                q, k, dimension_numbers=(((1,), (1,)), ((), ())),
                preferred_element_type=jnp.float32) * scale
            s = s + V(mask_name)
            s = s - jnp.max(s, axis=-1, keepdims=True)
            e = jnp.exp(s)
            inv = pl.reciprocal(jnp.sum(e, axis=-1, keepdims=True), approx=False)
            return dot(e * inv, v)

        def self_mha(x, p, mask_name):
            qkv = dot(x, M(p + "_qkv")) + V(p + "_bqkv")          # (M, 3*dh)
            h = attn(qkv[:, 0:dh], qkv[:, dh:2 * dh], qkv[:, 2 * dh:3 * dh],
                     mask_name)
            return dot(h, M(p + "_wo"))                           # (M, D)

        def cross_mha(xq, xkv):
            q = dot(xq, M("d2_q")) + V("d2_bq")                   # (Mq, dh)
            kv = dot(xkv, M("d2_kv")) + V("d2_bkv")               # (Mk, 2*dh)
            h = attn(q, kv[:, 0:dh], kv[:, dh:2 * dh], "mask_x")
            return dot(h, M("d2_wo"))

        def layernorm(x, p):
            mu = jnp.mean(x, axis=-1, keepdims=True)
            xc = x - mu
            var = jnp.mean(xc * xc, axis=-1, keepdims=True)
            return xc * jax.lax.rsqrt(var + LN_EPS) * V(p + "_g") + V(p + "_b")

        def ffn(x, p):
            h = jnp.maximum(dot(x, M(p + "_ff1")), 0.0)
            return dot(h, M(p + "_ff2"))

        # ---------------- encoder (only last layer matters: ref loop bug) ----
        x = dot(src_ref[...], M("in1")) + V("pe_src")             # (B*Ss, D)
        mh = self_mha(x, "e", "mask_e")
        h1 = layernorm(x + mh, "e_ln0")
        enc = layernorm(ffn(h1, "e") + h1, "e_ln1")               # (B*Ss, D)

        # ---------------- decoder (only last layer matters) ------------------
        y = tgt_ref[...] * V("in2_w") + V("pe_tgt")               # (B*St, D)
        mh1 = self_mha(y, "d1", "mask_d")
        a1 = layernorm(mh1 + y, "d_ln0")
        cross = cross_mha(a1, enc)
        a2 = layernorm(cross + a1, "d_ln1")
        dec = layernorm(ffn(a2, "d") + a2, "d_ln2")               # (B*St, D)

        # ---------------- output head (folded Linear->Flatten->Linear) -------
        tmp = dot(V("head_w"), dec)                               # (B, D)
        fin = jnp.sum(tmp * V("out1_w"), axis=-1, keepdims=True) + V("out_const")
        out_ref[...] = fin                                        # (B, 1)

    return kernel


# ----------------------------- trace-time folding + call ----------------------
def transformer_forward(params, src, target):
    B, s_src, _ = src.shape
    _, s_tgt, _ = target.shape
    D, H, dh = INPUT_DIM, NUM_HEADS, HEAD_DIM
    pe = params["pe"]

    # Reference loop bug: only the LAST encoder/decoder layer's output is used.
    enc_p = params["enc_layers"][-1]
    dec_p = params["dec_layers"][-1]

    def fold_qkv(p):
        wq = (p["Wmq"] @ p["Wq"]).T                 # (D, dh)
        wk = (p["Wmk"] @ p["Wk"]).T
        wv = (p["Wmv"] @ p["Wv"]).T
        w = jnp.concatenate([wq, wk, wv], axis=1)   # (D, 3*dh) fused QKV
        b = jnp.concatenate([p["bmq"], p["bmk"], p["bmv"]]).reshape(1, 3 * dh)
        # identical heads -> sum Wo's H column blocks, pre-transposed (dh, D)
        wo = p["Wo"].reshape(D, H, dh).sum(axis=1).T
        return w, b, wo

    e_w, e_b, e_wo = fold_qkv(enc_p["mha"])
    d1_w, d1_b, d1_wo = fold_qkv(dec_p["mha1"])
    d2_w, d2_b, d2_wo = fold_qkv(dec_p["mha2"])
    d2_wq, d2_wkv = d2_w[:, :dh], d2_w[:, dh:]
    d2_bq, d2_bkv = d2_b[:, :dh], d2_b[:, dh:]

    mats, moff = _pack_slab([
        ("in1", params["in1_W"].T),                 # (4, D)
        ("e_qkv", e_w), ("e_wo", e_wo),
        ("e_ff1", enc_p["ff_W1"].T), ("e_ff2", enc_p["ff_W2"].T),
        ("d1_qkv", d1_w), ("d1_wo", d1_wo),
        ("d2_q", d2_wq), ("d2_kv", d2_wkv), ("d2_wo", d2_wo),
        ("d_ff1", dec_p["ff_W1"].T), ("d_ff2", dec_p["ff_W2"].T),
    ])

    def block_mask(sq, sk):
        # 0 inside same-batch blocks, -1e9 across batches (same value the
        # reference uses for masked_fill) -> exact block-diagonal attention.
        blk = jnp.kron(jnp.eye(B, dtype=jnp.float32),
                       jnp.ones((sq, sk), jnp.float32))
        return (blk - 1.0) * 1e9

    vec_entries = [
        ("pe_src", jnp.tile(pe[:s_src] + params["in1_b"].reshape(1, D), (B, 1))),
        ("pe_tgt", jnp.tile(pe[:s_tgt] + params["in2_b"].reshape(1, D), (B, 1))),
        ("in2_w", params["in2_W"].reshape(1, D)),
        ("e_bqkv", e_b), ("d1_bqkv", d1_b),
        ("d2_bq", d2_bq), ("d2_bkv", d2_bkv),
        ("out1_w", params["out1_W"].reshape(1, D)),
        ("head_w", jnp.kron(jnp.eye(B, dtype=jnp.float32),
                            params["out2_W"].reshape(1, s_tgt))),   # (B, B*St)
        ("out_const", params["out1_b"].reshape(1, 1) * jnp.sum(params["out2_W"])
                      + params["out2_b"].reshape(1, 1)),
        ("mask_e", block_mask(s_src, s_src)),
        ("mask_d", block_mask(s_tgt, s_tgt)),
        ("mask_x", block_mask(s_tgt, s_src)),
    ]
    for nm, pfx in (("e_ln0", "ln0"), ("e_ln1", "ln1")):
        vec_entries.append((nm + "_g", enc_p[pfx + "_g"].reshape(1, D)))
        vec_entries.append((nm + "_b", enc_p[pfx + "_b"].reshape(1, D)))
    for nm, pfx in (("d_ln0", "ln0"), ("d_ln1", "ln1"), ("d_ln2", "ln2")):
        vec_entries.append((nm + "_g", dec_p[pfx + "_g"].reshape(1, D)))
        vec_entries.append((nm + "_b", dec_p[pfx + "_b"].reshape(1, D)))

    vecs, voff = _pack_slab(vec_entries)

    src_flat = src.reshape(B * s_src, src.shape[-1])        # (B*Ss, 4)
    tgt_flat = target.reshape(B * s_tgt, target.shape[-1])  # (B*St, 1)

    out = pl.pallas_call(
        _make_kernel(moff, voff),
        out_shape=jax.ShapeDtypeStruct((B, 1), jnp.float32),
        in_specs=[pl.BlockSpec(memory_space=pltpu.MemorySpace.VMEM)] * 4,
        out_specs=pl.BlockSpec(memory_space=pltpu.MemorySpace.VMEM),
    )(mats, vecs, src_flat, tgt_flat)
    return out


# ----------------------------- pure-JAX reference -----------------------------
def _reference_forward(params, src, target):
    """Straight transcription of the PyTorch module (incl. its quirks)."""
    H = NUM_HEADS
    pe = params["pe"]

    def linear(x, w, b=None):
        y = x @ w.T
        return y if b is None else y + b

    def attention(q, k, v):
        d = k.shape[-1]
        s = jnp.einsum("bqd,bkd->bqk", q, k) / (d ** 0.5)
        return jnp.einsum("bqk,bkd->bqd", jax.nn.softmax(s, axis=-1), v)

    def mha(p, xq, xkv):
        q = linear(xq, p["Wq"]); k = linear(xkv, p["Wk"]); v = linear(xkv, p["Wv"])
        heads = []
        for _ in range(H):
            heads.append(attention(linear(q, p["Wmq"], p["bmq"]),
                                   linear(k, p["Wmk"], p["bmk"]),
                                   linear(v, p["Wmv"], p["bmv"])))
        return linear(jnp.concatenate(heads, axis=-1), p["Wo"])

    def ln(x, gamma, beta):
        mu = x.mean(-1, keepdims=True)
        var = ((x - mu) ** 2).mean(-1, keepdims=True)
        return (x - mu) / jnp.sqrt(var + LN_EPS) * gamma + beta

    def ffn(p, x):
        return jnp.maximum(linear(x, p["ff_W1"]), 0.0) @ p["ff_W2"].T

    def enc_layer(p, x):
        h = ln(x + mha(p["mha"], x, x), p["ln0_g"], p["ln0_b"])
        return ln(ffn(p, h) + h, p["ln1_g"], p["ln1_b"])

    def dec_layer(p, t, e):
        h1 = ln(mha(p["mha1"], t, t) + t, p["ln0_g"], p["ln0_b"])
        h2 = ln(mha(p["mha2"], h1, e) + h1, p["ln1_g"], p["ln1_b"])
        return ln(ffn(p, h2) + h2, p["ln2_g"], p["ln2_b"])

    B, s_src, _ = src.shape
    _, s_tgt, _ = target.shape
    x = linear(src, params["in1_W"], params["in1_b"]) + pe[None, :s_src]
    enc = x
    for p in params["enc_layers"]:        # reference bug: each layer sees x
        enc = enc_layer(p, x)
    y = linear(target, params["in2_W"], params["in2_b"]) + pe[None, :s_tgt]
    dec = y
    for p in params["dec_layers"]:        # reference bug: each layer sees y
        dec = dec_layer(p, y, enc)
    o1 = linear(dec, params["out1_W"], params["out1_b"])      # (B, St, 1)
    return linear(o1.reshape(B, s_tgt), params["out2_W"], params["out2_b"])


# ----------------------------- parameter init --------------------------------
def make_position_encoding(D, max_seq_len):
    pos = jnp.arange(max_seq_len, dtype=jnp.float32)[:, None]
    item = 1.0 / (10000.0 ** (jnp.arange(0, D, 2, dtype=jnp.float32) / D))
    tmp = pos * item
    pe = jnp.zeros((max_seq_len, D), jnp.float32)
    pe = pe.at[:, 0::2].set(jnp.sin(tmp))
    pe = pe.at[:, 1::2].set(jnp.cos(tmp))
    return pe


def init_params(key):
    D, dh, mid = INPUT_DIM, HEAD_DIM, MIDDLE_DIM
    kit = iter(jax.random.split(key, 512))

    def lin_w(out_d, in_d):
        return (jax.random.normal(next(kit), (out_d, in_d), jnp.float32)
                / jnp.sqrt(jnp.float32(in_d)))

    def lin_b(out_d):
        return jax.random.normal(next(kit), (out_d,), jnp.float32) * 0.01

    def mha_params():
        return dict(
            Wq=lin_w(D, D), Wk=lin_w(D, D), Wv=lin_w(D, D),
            Wmq=lin_w(dh, D), bmq=lin_b(dh),
            Wmk=lin_w(dh, D), bmk=lin_b(dh),
            Wmv=lin_w(dh, D), bmv=lin_b(dh),
            Wo=lin_w(D, D),
        )

    def enc_layer_params():
        return dict(
            mha=mha_params(),
            ln0_g=jnp.ones((D,), jnp.float32), ln0_b=jnp.zeros((D,), jnp.float32),
            ln1_g=jnp.ones((D,), jnp.float32), ln1_b=jnp.zeros((D,), jnp.float32),
            ff_W1=lin_w(mid, D), ff_W2=lin_w(D, mid),
        )

    def dec_layer_params():
        return dict(
            mha1=mha_params(), mha2=mha_params(),
            ln0_g=jnp.ones((D,), jnp.float32), ln0_b=jnp.zeros((D,), jnp.float32),
            ln1_g=jnp.ones((D,), jnp.float32), ln1_b=jnp.zeros((D,), jnp.float32),
            ln2_g=jnp.ones((D,), jnp.float32), ln2_b=jnp.zeros((D,), jnp.float32),
            ff_W1=lin_w(mid, D), ff_W2=lin_w(D, mid),
        )

    return dict(
        in1_W=lin_w(D, 4), in1_b=lin_b(D),
        in2_W=lin_w(D, 1), in2_b=lin_b(D),
        out1_W=lin_w(1, D), out1_b=lin_b(1),
        out2_W=lin_w(1, TGT_SEQ), out2_b=lin_b(1),
        pe=make_position_encoding(D, MAX_SEQ_LEN),
        enc_layers=[enc_layer_params() for _ in range(NUM_LAYERS)],
        dec_layers=[dec_layer_params() for _ in range(NUM_LAYERS)],
    )


# ----------------------------------- main -------------------------------------
if __name__ == "__main__":
    key = jax.random.PRNGKey(0)
    pkey, skey, tkey = jax.random.split(key, 3)
    params = init_params(pkey)

    src = jax.random.normal(skey, (BATCH, SRC_SEQ, 4), jnp.float32)
    target = jax.random.normal(tkey, (BATCH, TGT_SEQ, 1), jnp.float32)

    fwd = jax.jit(transformer_forward)
    out = jax.block_until_ready(fwd(params, src, target))
    assert out.shape == (BATCH, 1), out.shape
    assert bool(jnp.all(jnp.isfinite(out)))

    # numerical check against a pure-JAX transcription of the PyTorch module
    ref = _reference_forward(params, src, target)
    assert bool(jnp.allclose(out, ref, rtol=1e-3, atol=1e-3)), (out, ref)

    print("KERNEL_OK")
</pallas_src>

<mosaic_0001>
module attributes {stable_mosaic.version = 11 : i64} {
  func.func @kernel(%arg0: memref<352x128xf32, #tpu.memory_space<vmem>>, %arg1: memref<248x128xf32, #tpu.memory_space<vmem>>, %arg2: memref<16x4xf32, #tpu.memory_space<vmem>>, %arg3: memref<20x1xf32, #tpu.memory_space<vmem>>, %arg4: memref<2x1xf32, #tpu.memory_space<vmem>>) attributes {dimension_semantics = [], scalar_prefetch = 0 : i64, scratch_operands = 0 : i64, tpu.core_type = #tpu.core_type<tc>} {
    %c0 = arith.constant 0 : index
    %c0_0 = arith.constant 0 : index
    %0 = vector.load %arg2[%c0, %c0_0] : memref<16x4xf32, #tpu.memory_space<vmem>>, vector<16x4xf32>
    %c0_1 = arith.constant 0 : index
    %c0_2 = arith.constant 0 : index
    %1 = vector.load %arg0[%c0_1, %c0_2] : memref<352x128xf32, #tpu.memory_space<vmem>>, vector<4x32xf32>
    %cst = arith.constant dense<0.000000e+00> : vector<16x32xf32>
    %2 = tpu.matmul %0, %1, %cst {dimension_numbers = #tpu.dot_dimension_numbers<[1], [0], [0], [1], [0, 0, 1, 1], [], []>} : vector<16x4xf32>, vector<4x32xf32>, vector<16x32xf32> -> vector<16x32xf32>
    %c0_3 = arith.constant 0 : index
    %c0_4 = arith.constant 0 : index
    %3 = vector.load %arg1[%c0_3, %c0_4] : memref<248x128xf32, #tpu.memory_space<vmem>>, vector<16x32xf32>
    %4 = arith.addf %2, %3 : vector<16x32xf32>
    %c8 = arith.constant 8 : index
    %c0_5 = arith.constant 0 : index
    %5 = vector.load %arg0[%c8, %c0_5] : memref<352x128xf32, #tpu.memory_space<vmem>>, vector<32x24xf32>
    %cst_6 = arith.constant dense<0.000000e+00> : vector<16x24xf32>
    %6 = tpu.matmul %4, %5, %cst_6 {dimension_numbers = #tpu.dot_dimension_numbers<[1], [0], [0], [1], [0, 0, 1, 1], [], []>} : vector<16x32xf32>, vector<32x24xf32>, vector<16x24xf32> -> vector<16x24xf32>
    %c48 = arith.constant 48 : index
    %c0_7 = arith.constant 0 : index
    %7 = vector.load %arg1[%c48, %c0_7] : memref<248x128xf32, #tpu.memory_space<vmem>>, vector<1x24xf32>
    %8 = vector.broadcast %7 : vector<1x24xf32> to vector<16x24xf32>
    %9 = arith.addf %6, %8 : vector<16x24xf32>
    %10 = vector.extract_strided_slice %9 {offsets = [0, 0], sizes = [16, 8], strides = [1, 1]} : vector<16x24xf32> to vector<16x8xf32>
    %11 = vector.extract_strided_slice %9 {offsets = [0, 8], sizes = [16, 8], strides = [1, 1]} : vector<16x24xf32> to vector<16x8xf32>
    %12 = vector.extract_strided_slice %9 {offsets = [0, 16], sizes = [16, 8], strides = [1, 1]} : vector<16x24xf32> to vector<16x8xf32>
    %cst_8 = arith.constant dense<0.000000e+00> : vector<16x16xf32>
    %13 = tpu.matmul %10, %11, %cst_8 {dimension_numbers = #tpu.dot_dimension_numbers<[1], [1], [0], [0], [0, 0, 1, 0], [], []>} : vector<16x8xf32>, vector<16x8xf32>, vector<16x16xf32> -> vector<16x16xf32>
    %cst_9 = arith.constant 0.353553385 : f32
    %14 = vector.broadcast %cst_9 : f32 to vector<16x16xf32>
    %15 = arith.mulf %13, %14 : vector<16x16xf32>
    %c104 = arith.constant 104 : index
    %c0_10 = arith.constant 0 : index
    %16 = vector.load %arg1[%c104, %c0_10] : memref<248x128xf32, #tpu.memory_space<vmem>>, vector<16x16xf32>
    %17 = arith.addf %15, %16 : vector<16x16xf32>
    %cst_11 = arith.constant dense<0xFF800000> : vector<16xf32>
    %18 = vector.multi_reduction <maximumf>, %17, %cst_11 [1] : vector<16x16xf32> to vector<16xf32>
    %19 = vector.shape_cast %18 : vector<16xf32> to vector<16x1xf32>
    %20 = vector.broadcast %19 : vector<16x1xf32> to vector<16x16xf32>
    %21 = arith.subf %17, %20 : vector<16x16xf32>
    %22 = math.exp %21 : vector<16x16xf32>
    %cst_12 = arith.constant dense<0.000000e+00> : vector<16xf32>
    %23 = vector.multi_reduction <add>, %22, %cst_12 [1] : vector<16x16xf32> to vector<16xf32>
    %24 = vector.shape_cast %23 : vector<16xf32> to vector<16x1xf32>
    %25 = tpu.reciprocal %24 : vector<16x1xf32> -> vector<16x1xf32>
    %26 = vector.broadcast %25 : vector<16x1xf32> to vector<16x16xf32>
    %27 = arith.mulf %22, %26 : vector<16x16xf32>
    %cst_13 = arith.constant dense<0.000000e+00> : vector<16x8xf32>
    %28 = tpu.matmul %27, %12, %cst_13 {dimension_numbers = #tpu.dot_dimension_numbers<[1], [0], [0], [1], [0, 0, 1, 1], [], []>} : vector<16x16xf32>, vector<16x8xf32>, vector<16x8xf32> -> vector<16x8xf32>
    %c40 = arith.constant 40 : index
    %c0_14 = arith.constant 0 : index
    %29 = vector.load %arg0[%c40, %c0_14] : memref<352x128xf32, #tpu.memory_space<vmem>>, vector<8x32xf32>
    %cst_15 = arith.constant dense<0.000000e+00> : vector<16x32xf32>
    %30 = tpu.matmul %28, %29, %cst_15 {dimension_numbers = #tpu.dot_dimension_numbers<[1], [0], [0], [1], [0, 0, 1, 1], [], []>} : vector<16x8xf32>, vector<8x32xf32>, vector<16x32xf32> -> vector<16x32xf32>
    %31 = arith.addf %4, %30 : vector<16x32xf32>
    %cst_16 = arith.constant dense<0.000000e+00> : vector<16xf32>
    %32 = vector.multi_reduction <add>, %31, %cst_16 [1] : vector<16x32xf32> to vector<16xf32>
    %33 = vector.shape_cast %32 : vector<16xf32> to vector<16x1xf32>
    %cst_17 = arith.constant 3.200000e+01 : f32
    %34 = vector.broadcast %cst_17 : f32 to vector<16x1xf32>
    %35 = arith.divf %33, %34 : vector<16x1xf32>
    %36 = vector.broadcast %35 : vector<16x1xf32> to vector<16x32xf32>
    %37 = arith.subf %31, %36 : vector<16x32xf32>
    %38 = arith.mulf %37, %37 : vector<16x32xf32>
    %cst_18 = arith.constant dense<0.000000e+00> : vector<16xf32>
    %39 = vector.multi_reduction <add>, %38, %cst_18 [1] : vector<16x32xf32> to vector<16xf32>
    %40 = vector.shape_cast %39 : vector<16xf32> to vector<16x1xf32>
    %cst_19 = arith.constant 3.200000e+01 : f32
    %41 = vector.broadcast %cst_19 : f32 to vector<16x1xf32>
    %42 = arith.divf %40, %41 : vector<16x1xf32>
    %cst_20 = arith.constant 9.99999974E-6 : f32
    %43 = vector.broadcast %cst_20 : f32 to vector<16x1xf32>
    %44 = arith.addf %42, %43 : vector<16x1xf32>
    %45 = math.rsqrt %44 : vector<16x1xf32>
    %46 = vector.broadcast %45 : vector<16x1xf32> to vector<16x32xf32>
    %47 = arith.mulf %37, %46 : vector<16x32xf32>
    %c168 = arith.constant 168 : index
    %c0_21 = arith.constant 0 : index
    %48 = vector.load %arg1[%c168, %c0_21] : memref<248x128xf32, #tpu.memory_space<vmem>>, vector<1x32xf32>
    %49 = vector.broadcast %48 : vector<1x32xf32> to vector<16x32xf32>
    %50 = arith.mulf %47, %49 : vector<16x32xf32>
    %c176 = arith.constant 176 : index
    %c0_22 = arith.constant 0 : index
    %51 = vector.load %arg1[%c176, %c0_22] : memref<248x128xf32, #tpu.memory_space<vmem>>, vector<1x32xf32>
    %52 = vector.broadcast %51 : vector<1x32xf32> to vector<16x32xf32>
    %53 = arith.addf %50, %52 : vector<16x32xf32>
    %c48_23 = arith.constant 48 : index
    %c0_24 = arith.constant 0 : index
    %54 = vector.load %arg0[%c48_23, %c0_24] : memref<352x128xf32, #tpu.memory_space<vmem>>, vector<32x64xf32>
    %cst_25 = arith.constant dense<0.000000e+00> : vector<16x64xf32>
    %55 = tpu.matmul %53, %54, %cst_25 {dimension_numbers = #tpu.dot_dimension_numbers<[1], [0], [0], [1], [0, 0, 1, 1], [], []>} : vector<16x32xf32>, vector<32x64xf32>, vector<16x64xf32> -> vector<16x64xf32>
    %cst_26 = arith.constant 0.000000e+00 : f32
    %56 = vector.broadcast %cst_26 : f32 to vector<16x64xf32>
    %57 = arith.maximumf %55, %56 : vector<16x64xf32>
    %c80 = arith.constant 80 : index
    %c0_27 = arith.constant 0 : index
    %58 = vector.load %arg0[%c80, %c0_27] : memref<352x128xf32, #tpu.memory_space<vmem>>, vector<64x32xf32>
    %cst_28 = arith.constant dense<0.000000e+00> : vector<16x32xf32>
    %59 = tpu.matmul %57, %58, %cst_28 {dimension_numbers = #tpu.dot_dimension_numbers<[1], [0], [0], [1], [0, 0, 1, 1], [], []>} : vector<16x64xf32>, vector<64x32xf32>, vector<16x32xf32> -> vector<16x32xf32>
    %60 = arith.addf %59, %53 : vector<16x32xf32>
    %cst_29 = arith.constant dense<0.000000e+00> : vector<16xf32>
    %61 = vector.multi_reduction <add>, %60, %cst_29 [1] : vector<16x32xf32> to vector<16xf32>
    %62 = vector.shape_cast %61 : vector<16xf32> to vector<16x1xf32>
    %cst_30 = arith.constant 3.200000e+01 : f32
    %63 = vector.broadcast %cst_30 : f32 to vector<16x1xf32>
    %64 = arith.divf %62, %63 : vector<16x1xf32>
    %65 = vector.broadcast %64 : vector<16x1xf32> to vector<16x32xf32>
    %66 = arith.subf %60, %65 : vector<16x32xf32>
    %67 = arith.mulf %66, %66 : vector<16x32xf32>
    %cst_31 = arith.constant dense<0.000000e+00> : vector<16xf32>
    %68 = vector.multi_reduction <add>, %67, %cst_31 [1] : vector<16x32xf32> to vector<16xf32>
    %69 = vector.shape_cast %68 : vector<16xf32> to vector<16x1xf32>
    %cst_32 = arith.constant 3.200000e+01 : f32
    %70 = vector.broadcast %cst_32 : f32 to vector<16x1xf32>
    %71 = arith.divf %69, %70 : vector<16x1xf32>
    %cst_33 = arith.constant 9.99999974E-6 : f32
    %72 = vector.broadcast %cst_33 : f32 to vector<16x1xf32>
    %73 = arith.addf %71, %72 : vector<16x1xf32>
    %74 = math.rsqrt %73 : vector<16x1xf32>
    %75 = vector.broadcast %74 : vector<16x1xf32> to vector<16x32xf32>
    %76 = arith.mulf %66, %75 : vector<16x32xf32>
    %c184 = arith.constant 184 : index
    %c0_34 = arith.constant 0 : index
    %77 = vector.load %arg1[%c184, %c0_34] : memref<248x128xf32, #tpu.memory_space<vmem>>, vector<1x32xf32>
    %78 = vector.broadcast %77 : vector<1x32xf32> to vector<16x32xf32>
    %79 = arith.mulf %76, %78 : vector<16x32xf32>
    %c192 = arith.constant 192 : index
    %c0_35 = arith.constant 0 : index
    %80 = vector.load %arg1[%c192, %c0_35] : memref<248x128xf32, #tpu.memory_space<vmem>>, vector<1x32xf32>
    %81 = vector.broadcast %80 : vector<1x32xf32> to vector<16x32xf32>
    %82 = arith.addf %79, %81 : vector<16x32xf32>
    %c0_36 = arith.constant 0 : index
    %c0_37 = arith.constant 0 : index
    %83 = vector.load %arg3[%c0_36, %c0_37] : memref<20x1xf32, #tpu.memory_space<vmem>>, vector<20x1xf32>
    %c40_38 = arith.constant 40 : index
    %c0_39 = arith.constant 0 : index
    %84 = vector.load %arg1[%c40_38, %c0_39] : memref<248x128xf32, #tpu.memory_space<vmem>>, vector<1x32xf32>
    %85 = vector.broadcast %83 : vector<20x1xf32> to vector<20x32xf32>
    %86 = vector.broadcast %84 : vector<1x32xf32> to vector<20x32xf32>
    %87 = arith.mulf %85, %86 : vector<20x32xf32>
    %c16 = arith.constant 16 : index
    %c0_40 = arith.constant 0 : index
    %88 = vector.load %arg1[%c16, %c0_40] : memref<248x128xf32, #tpu.memory_space<vmem>>, vector<20x32xf32>
    %89 = arith.addf %87, %88 : vector<20x32xf32>
    %c144 = arith.constant 144 : index
    %c0_41 = arith.constant 0 : index
    %90 = vector.load %arg0[%c144, %c0_41] : memref<352x128xf32, #tpu.memory_space<vmem>>, vector<32x24xf32>
    %cst_42 = arith.constant dense<0.000000e+00> : vector<20x24xf32>
    %91 = tpu.matmul %89, %90, %cst_42 {dimension_numbers = #tpu.dot_dimension_numbers<[1], [0], [0], [1], [0, 0, 1, 1], [], []>} : vector<20x32xf32>, vector<32x24xf32>, vector<20x24xf32> -> vector<20x24xf32>
    %c56 = arith.constant 56 : index
    %c0_43 = arith.constant 0 : index
    %92 = vector.load %arg1[%c56, %c0_43] : memref<248x128xf32, #tpu.memory_space<vmem>>, vector<1x24xf32>
    %93 = vector.broadcast %92 : vector<1x24xf32> to vector<20x24xf32>
    %94 = arith.addf %91, %93 : vector<20x24xf32>
    %95 = vector.extract_strided_slice %94 {offsets = [0, 0], sizes = [20, 8], strides = [1, 1]} : vector<20x24xf32> to vector<20x8xf32>
    %96 = vector.extract_strided_slice %94 {offsets = [0, 8], sizes = [20, 8], strides = [1, 1]} : vector<20x24xf32> to vector<20x8xf32>
    %97 = vector.extract_strided_slice %94 {offsets = [0, 16], sizes = [20, 8], strides = [1, 1]} : vector<20x24xf32> to vector<20x8xf32>
    %cst_44 = arith.constant dense<0.000000e+00> : vector<20x20xf32>
    %98 = tpu.matmul %95, %96, %cst_44 {dimension_numbers = #tpu.dot_dimension_numbers<[1], [1], [0], [0], [0, 0, 1, 0], [], []>} : vector<20x8xf32>, vector<20x8xf32>, vector<20x20xf32> -> vector<20x20xf32>
    %cst_45 = arith.constant 0.353553385 : f32
    %99 = vector.broadcast %cst_45 : f32 to vector<20x20xf32>
    %100 = arith.mulf %98, %99 : vector<20x20xf32>
    %c120 = arith.constant 120 : index
    %c0_46 = arith.constant 0 : index
    %101 = vector.load %arg1[%c120, %c0_46] : memref<248x128xf32, #tpu.memory_space<vmem>>, vector<20x20xf32>
    %102 = arith.addf %100, %101 : vector<20x20xf32>
    %cst_47 = arith.constant dense<0xFF800000> : vector<20xf32>
    %103 = vector.multi_reduction <maximumf>, %102, %cst_47 [1] : vector<20x20xf32> to vector<20xf32>
    %104 = vector.shape_cast %103 : vector<20xf32> to vector<20x1xf32>
    %105 = vector.broadcast %104 : vector<20x1xf32> to vector<20x20xf32>
    %106 = arith.subf %102, %105 : vector<20x20xf32>
    %107 = math.exp %106 : vector<20x20xf32>
    %cst_48 = arith.constant dense<0.000000e+00> : vector<20xf32>
    %108 = vector.multi_reduction <add>, %107, %cst_48 [1] : vector<20x20xf32> to vector<20xf32>
    %109 = vector.shape_cast %108 : vector<20xf32> to vector<20x1xf32>
    %110 = tpu.reciprocal %109 : vector<20x1xf32> -> vector<20x1xf32>
    %111 = vector.broadcast %110 : vector<20x1xf32> to vector<20x20xf32>
    %112 = arith.mulf %107, %111 : vector<20x20xf32>
    %cst_49 = arith.constant dense<0.000000e+00> : vector<20x8xf32>
    %113 = tpu.matmul %112, %97, %cst_49 {dimension_numbers = #tpu.dot_dimension_numbers<[1], [0], [0], [1], [0, 0, 1, 1], [], []>} : vector<20x20xf32>, vector<20x8xf32>, vector<20x8xf32> -> vector<20x8xf32>
    %c176_50 = arith.constant 176 : index
    %c0_51 = arith.constant 0 : index
    %114 = vector.load %arg0[%c176_50, %c0_51] : memref<352x128xf32, #tpu.memory_space<vmem>>, vector<8x32xf32>
    %cst_52 = arith.constant dense<0.000000e+00> : vector<20x32xf32>
    %115 = tpu.matmul %113, %114, %cst_52 {dimension_numbers = #tpu.dot_dimension_numbers<[1], [0], [0], [1], [0, 0, 1, 1], [], []>} : vector<20x8xf32>, vector<8x32xf32>, vector<20x32xf32> -> vector<20x32xf32>
    %116 = arith.addf %115, %89 : vector<20x32xf32>
    %cst_53 = arith.constant dense<0.000000e+00> : vector<20xf32>
    %117 = vector.multi_reduction <add>, %116, %cst_53 [1] : vector<20x32xf32> to vector<20xf32>
    %118 = vector.shape_cast %117 : vector<20xf32> to vector<20x1xf32>
    %cst_54 = arith.constant 3.200000e+01 : f32
    %119 = vector.broadcast %cst_54 : f32 to vector<20x1xf32>
    %120 = arith.divf %118, %119 : vector<20x1xf32>
    %121 = vector.broadcast %120 : vector<20x1xf32> to vector<20x32xf32>
    %122 = arith.subf %116, %121 : vector<20x32xf32>
    %123 = arith.mulf %122, %122 : vector<20x32xf32>
    %cst_55 = arith.constant dense<0.000000e+00> : vector<20xf32>
    %124 = vector.multi_reduction <add>, %123, %cst_55 [1] : vector<20x32xf32> to vector<20xf32>
    %125 = vector.shape_cast %124 : vector<20xf32> to vector<20x1xf32>
    %cst_56 = arith.constant 3.200000e+01 : f32
    %126 = vector.broadcast %cst_56 : f32 to vector<20x1xf32>
    %127 = arith.divf %125, %126 : vector<20x1xf32>
    %cst_57 = arith.constant 9.99999974E-6 : f32
    %128 = vector.broadcast %cst_57 : f32 to vector<20x1xf32>
    %129 = arith.addf %127, %128 : vector<20x1xf32>
    %130 = math.rsqrt %129 : vector<20x1xf32>
    %131 = vector.broadcast %130 : vector<20x1xf32> to vector<20x32xf32>
    %132 = arith.mulf %122, %131 : vector<20x32xf32>
    %c200 = arith.constant 200 : index
    %c0_58 = arith.constant 0 : index
    %133 = vector.load %arg1[%c200, %c0_58] : memref<248x128xf32, #tpu.memory_space<vmem>>, vector<1x32xf32>
    %134 = vector.broadcast %133 : vector<1x32xf32> to vector<20x32xf32>
    %135 = arith.mulf %132, %134 : vector<20x32xf32>
    %c208 = arith.constant 208 : index
    %c0_59 = arith.constant 0 : index
    %136 = vector.load %arg1[%c208, %c0_59] : memref<248x128xf32, #tpu.memory_space<vmem>>, vector<1x32xf32>
    %137 = vector.broadcast %136 : vector<1x32xf32> to vector<20x32xf32>
    %138 = arith.addf %135, %137 : vector<20x32xf32>
    %c184_60 = arith.constant 184 : index
    %c0_61 = arith.constant 0 : index
    %139 = vector.load %arg0[%c184_60, %c0_61] : memref<352x128xf32, #tpu.memory_space<vmem>>, vector<32x8xf32>
    %cst_62 = arith.constant dense<0.000000e+00> : vector<20x8xf32>
    %140 = tpu.matmul %138, %139, %cst_62 {dimension_numbers = #tpu.dot_dimension_numbers<[1], [0], [0], [1], [0, 0, 1, 1], [], []>} : vector<20x32xf32>, vector<32x8xf32>, vector<20x8xf32> -> vector<20x8xf32>
    %c64 = arith.constant 64 : index
    %c0_63 = arith.constant 0 : index
    %141 = vector.load %arg1[%c64, %c0_63] : memref<248x128xf32, #tpu.memory_space<vmem>>, vector<1x8xf32>
    %142 = vector.broadcast %141 : vector<1x8xf32> to vector<20x8xf32>
    %143 = arith.addf %140, %142 : vector<20x8xf32>
    %c216 = arith.constant 216 : index
    %c0_64 = arith.constant 0 : index
    %144 = vector.load %arg0[%c216, %c0_64] : memref<352x128xf32, #tpu.memory_space<vmem>>, vector<32x16xf32>
    %cst_65 = arith.constant dense<0.000000e+00> : vector<16x16xf32>
    %145 = tpu.matmul %82, %144, %cst_65 {dimension_numbers = #tpu.dot_dimension_numbers<[1], [0], [0], [1], [0, 0, 1, 1], [], []>} : vector<16x32xf32>, vector<32x16xf32>, vector<16x16xf32> -> vector<16x16xf32>
    %c72 = arith.constant 72 : index
    %c0_66 = arith.constant 0 : index
    %146 = vector.load %arg1[%c72, %c0_66] : memref<248x128xf32, #tpu.memory_space<vmem>>, vector<1x16xf32>
    %147 = vector.broadcast %146 : vector<1x16xf32> to vector<16x16xf32>
    %148 = arith.addf %145, %147 : vector<16x16xf32>
    %149 = vector.extract_strided_slice %148 {offsets = [0, 0], sizes = [16, 8], strides = [1, 1]} : vector<16x16xf32> to vector<16x8xf32>
    %150 = vector.extract_strided_slice %148 {offsets = [0, 8], sizes = [16, 8], strides = [1, 1]} : vector<16x16xf32> to vector<16x8xf32>
    %cst_67 = arith.constant dense<0.000000e+00> : vector<20x16xf32>
    %151 = tpu.matmul %143, %149, %cst_67 {dimension_numbers = #tpu.dot_dimension_numbers<[1], [1], [0], [0], [0, 0, 1, 0], [], []>} : vector<20x8xf32>, vector<16x8xf32>, vector<20x16xf32> -> vector<20x16xf32>
    %cst_68 = arith.constant 0.353553385 : f32
    %152 = vector.broadcast %cst_68 : f32 to vector<20x16xf32>
    %153 = arith.mulf %151, %152 : vector<20x16xf32>
    %c144_69 = arith.constant 144 : index
    %c0_70 = arith.constant 0 : index
    %154 = vector.load %arg1[%c144_69, %c0_70] : memref<248x128xf32, #tpu.memory_space<vmem>>, vector<20x16xf32>
    %155 = arith.addf %153, %154 : vector<20x16xf32>
    %cst_71 = arith.constant dense<0xFF800000> : vector<20xf32>
    %156 = vector.multi_reduction <maximumf>, %155, %cst_71 [1] : vector<20x16xf32> to vector<20xf32>
    %157 = vector.shape_cast %156 : vector<20xf32> to vector<20x1xf32>
    %158 = vector.broadcast %157 : vector<20x1xf32> to vector<20x16xf32>
    %159 = arith.subf %155, %158 : vector<20x16xf32>
    %160 = math.exp %159 : vector<20x16xf32>
    %cst_72 = arith.constant dense<0.000000e+00> : vector<20xf32>
    %161 = vector.multi_reduction <add>, %160, %cst_72 [1] : vector<20x16xf32> to vector<20xf32>
    %162 = vector.shape_cast %161 : vector<20xf32> to vector<20x1xf32>
    %163 = tpu.reciprocal %162 : vector<20x1xf32> -> vector<20x1xf32>
    %164 = vector.broadcast %163 : vector<20x1xf32> to vector<20x16xf32>
    %165 = arith.mulf %160, %164 : vector<20x16xf32>
    %cst_73 = arith.constant dense<0.000000e+00> : vector<20x8xf32>
    %166 = tpu.matmul %165, %150, %cst_73 {dimension_numbers = #tpu.dot_dimension_numbers<[1], [0], [0], [1], [0, 0, 1, 1], [], []>} : vector<20x16xf32>, vector<16x8xf32>, vector<20x8xf32> -> vector<20x8xf32>
    %c248 = arith.constant 248 : index
    %c0_74 = arith.constant 0 : index
    %167 = vector.load %arg0[%c248, %c0_74] : memref<352x128xf32, #tpu.memory_space<vmem>>, vector<8x32xf32>
    %cst_75 = arith.constant dense<0.000000e+00> : vector<20x32xf32>
    %168 = tpu.matmul %166, %167, %cst_75 {dimension_numbers = #tpu.dot_dimension_numbers<[1], [0], [0], [1], [0, 0, 1, 1], [], []>} : vector<20x8xf32>, vector<8x32xf32>, vector<20x32xf32> -> vector<20x32xf32>
    %169 = arith.addf %168, %138 : vector<20x32xf32>
    %cst_76 = arith.constant dense<0.000000e+00> : vector<20xf32>
    %170 = vector.multi_reduction <add>, %169, %cst_76 [1] : vector<20x32xf32> to vector<20xf32>
    %171 = vector.shape_cast %170 : vector<20xf32> to vector<20x1xf32>
    %cst_77 = arith.constant 3.200000e+01 : f32
    %172 = vector.broadcast %cst_77 : f32 to vector<20x1xf32>
    %173 = arith.divf %171, %172 : vector<20x1xf32>
    %174 = vector.broadcast %173 : vector<20x1xf32> to vector<20x32xf32>
    %175 = arith.subf %169, %174 : vector<20x32xf32>
    %176 = arith.mulf %175, %175 : vector<20x32xf32>
    %cst_78 = arith.constant dense<0.000000e+00> : vector<20xf32>
    %177 = vector.multi_reduction <add>, %176, %cst_78 [1] : vector<20x32xf32> to vector<20xf32>
    %178 = vector.shape_cast %177 : vector<20xf32> to vector<20x1xf32>
    %cst_79 = arith.constant 3.200000e+01 : f32
    %179 = vector.broadcast %cst_79 : f32 to vector<20x1xf32>
    %180 = arith.divf %178, %179 : vector<20x1xf32>
    %cst_80 = arith.constant 9.99999974E-6 : f32
    %181 = vector.broadcast %cst_80 : f32 to vector<20x1xf32>
    %182 = arith.addf %180, %181 : vector<20x1xf32>
    %183 = math.rsqrt %182 : vector<20x1xf32>
    %184 = vector.broadcast %183 : vector<20x1xf32> to vector<20x32xf32>
    %185 = arith.mulf %175, %184 : vector<20x32xf32>
    %c216_81 = arith.constant 216 : index
    %c0_82 = arith.constant 0 : index
    %186 = vector.load %arg1[%c216_81, %c0_82] : memref<248x128xf32, #tpu.memory_space<vmem>>, vector<1x32xf32>
    %187 = vector.broadcast %186 : vector<1x32xf32> to vector<20x32xf32>
    %188 = arith.mulf %185, %187 : vector<20x32xf32>
    %c224 = arith.constant 224 : index
    %c0_83 = arith.constant 0 : index
    %189 = vector.load %arg1[%c224, %c0_83] : memref<248x128xf32, #tpu.memory_space<vmem>>, vector<1x32xf32>
    %190 = vector.broadcast %189 : vector<1x32xf32> to vector<20x32xf32>
    %191 = arith.addf %188, %190 : vector<20x32xf32>
    %c256 = arith.constant 256 : index
    %c0_84 = arith.constant 0 : index
    %192 = vector.load %arg0[%c256, %c0_84] : memref<352x128xf32, #tpu.memory_space<vmem>>, vector<32x64xf32>
    %cst_85 = arith.constant dense<0.000000e+00> : vector<20x64xf32>
    %193 = tpu.matmul %191, %192, %cst_85 {dimension_numbers = #tpu.dot_dimension_numbers<[1], [0], [0], [1], [0, 0, 1, 1], [], []>} : vector<20x32xf32>, vector<32x64xf32>, vector<20x64xf32> -> vector<20x64xf32>
    %cst_86 = arith.constant 0.000000e+00 : f32
    %194 = vector.broadcast %cst_86 : f32 to vector<20x64xf32>
    %195 = arith.maximumf %193, %194 : vector<20x64xf32>
    %c288 = arith.constant 288 : index
    %c0_87 = arith.constant 0 : index
    %196 = vector.load %arg0[%c288, %c0_87] : memref<352x128xf32, #tpu.memory_space<vmem>>, vector<64x32xf32>
    %cst_88 = arith.constant dense<0.000000e+00> : vector<20x32xf32>
    %197 = tpu.matmul %195, %196, %cst_88 {dimension_numbers = #tpu.dot_dimension_numbers<[1], [0], [0], [1], [0, 0, 1, 1], [], []>} : vector<20x64xf32>, vector<64x32xf32>, vector<20x32xf32> -> vector<20x32xf32>
    %198 = arith.addf %197, %191 : vector<20x32xf32>
    %cst_89 = arith.constant dense<0.000000e+00> : vector<20xf32>
    %199 = vector.multi_reduction <add>, %198, %cst_89 [1] : vector<20x32xf32> to vector<20xf32>
    %200 = vector.shape_cast %199 : vector<20xf32> to vector<20x1xf32>
    %cst_90 = arith.constant 3.200000e+01 : f32
    %201 = vector.broadcast %cst_90 : f32 to vector<20x1xf32>
    %202 = arith.divf %200, %201 : vector<20x1xf32>
    %203 = vector.broadcast %202 : vector<20x1xf32> to vector<20x32xf32>
    %204 = arith.subf %198, %203 : vector<20x32xf32>
    %205 = arith.mulf %204, %204 : vector<20x32xf32>
    %cst_91 = arith.constant dense<0.000000e+00> : vector<20xf32>
    %206 = vector.multi_reduction <add>, %205, %cst_91 [1] : vector<20x32xf32> to vector<20xf32>
    %207 = vector.shape_cast %206 : vector<20xf32> to vector<20x1xf32>
    %cst_92 = arith.constant 3.200000e+01 : f32
    %208 = vector.broadcast %cst_92 : f32 to vector<20x1xf32>
    %209 = arith.divf %207, %208 : vector<20x1xf32>
    %cst_93 = arith.constant 9.99999974E-6 : f32
    %210 = vector.broadcast %cst_93 : f32 to vector<20x1xf32>
    %211 = arith.addf %209, %210 : vector<20x1xf32>
    %212 = math.rsqrt %211 : vector<20x1xf32>
    %213 = vector.broadcast %212 : vector<20x1xf32> to vector<20x32xf32>
    %214 = arith.mulf %204, %213 : vector<20x32xf32>
    %c232 = arith.constant 232 : index
    %c0_94 = arith.constant 0 : index
    %215 = vector.load %arg1[%c232, %c0_94] : memref<248x128xf32, #tpu.memory_space<vmem>>, vector<1x32xf32>
    %216 = vector.broadcast %215 : vector<1x32xf32> to vector<20x32xf32>
    %217 = arith.mulf %214, %216 : vector<20x32xf32>
    %c240 = arith.constant 240 : index
    %c0_95 = arith.constant 0 : index
    %218 = vector.load %arg1[%c240, %c0_95] : memref<248x128xf32, #tpu.memory_space<vmem>>, vector<1x32xf32>
    %219 = vector.broadcast %218 : vector<1x32xf32> to vector<20x32xf32>
    %220 = arith.addf %217, %219 : vector<20x32xf32>
    %c88 = arith.constant 88 : index
    %c0_96 = arith.constant 0 : index
    %221 = vector.load %arg1[%c88, %c0_96] : memref<248x128xf32, #tpu.memory_space<vmem>>, vector<2x20xf32>
    %cst_97 = arith.constant dense<0.000000e+00> : vector<2x32xf32>
    %222 = tpu.matmul %221, %220, %cst_97 {dimension_numbers = #tpu.dot_dimension_numbers<[1], [0], [0], [1], [0, 0, 1, 1], [], []>} : vector<2x20xf32>, vector<20x32xf32>, vector<2x32xf32> -> vector<2x32xf32>
    %c80_98 = arith.constant 80 : index
    %c0_99 = arith.constant 0 : index
    %223 = vector.load %arg1[%c80_98, %c0_99] : memref<248x128xf32, #tpu.memory_space<vmem>>, vector<1x32xf32>
    %224 = vector.broadcast %223 : vector<1x32xf32> to vector<2x32xf32>
    %225 = arith.mulf %222, %224 : vector<2x32xf32>
    %cst_100 = arith.constant dense<0.000000e+00> : vector<2xf32>
    %226 = vector.multi_reduction <add>, %225, %cst_100 [1] : vector<2x32xf32> to vector<2xf32>
    %227 = vector.shape_cast %226 : vector<2xf32> to vector<2x1xf32>
    %c96 = arith.constant 96 : index
    %c0_101 = arith.constant 0 : index
    %228 = vector.load %arg1[%c96, %c0_101] : memref<248x128xf32, #tpu.memory_space<vmem>>, vector<1x1xf32>
    %229 = vector.broadcast %228 : vector<1x1xf32> to vector<2x1xf32>
    %230 = arith.addf %227, %229 : vector<2x1xf32>
    %c0_102 = arith.constant 0 : index
    %c0_103 = arith.constant 0 : index
    %231 = vector.load %arg4[%c0_102, %c0_103] : memref<2x1xf32, #tpu.memory_space<vmem>>, vector<2x1xf32>
    tpu.vector_store %arg4[%c0_102, %c0_103], %230 {strides = array<i32>} : memref<2x1xf32, #tpu.memory_space<vmem>>, vector<2x1xf32>,
    return
  }
}

</mosaic_0001>

<llo_original>
// kernel: tile.19
$region0: #{tile.19}
  %s0 = inlined_call_operand.vmem [shape: f32[2,10,32], index: 0, kind: input, shape index: {}]
  %s1 = inlined_call_operand.vmem [shape: f32[20,32], index: 1, kind: output, shape index: {}]
  %v2 = vld [vmem:[%s0] sm:$0xff]
  %vm3 = vcmask 261120
  %4 = vst.msk [vmem:[%s1] sm:$0xff] %vm3, %v2
  %s5 = scalar_lea.vmem %s0, 8
  %v6 = vld [vmem:[%s5] sm:$0x3]
  %vm7 = vcmask 261120
  %s8 = scalar_lea.vmem %s1, 8
  %9 = vst.msk [vmem:[%s8] sm:$0x3] %vm7, %v6
  %s10 = scalar_lea.vmem %s0, 16
  %v11 = vld [vmem:[%s10] sm:$0xff]
  %vm12 = vcmask 261120
  %s13 = scalar_lea.vmem %s1, 10
  %14 = vst.msk [vmem:[%s13] sm:$0xff] %vm12, %v11
  %s15 = scalar_lea.vmem %s0, 24
  %v16 = vld [vmem:[%s15] sm:$0x3]
  %vm17 = vcmask 261120
  %s18 = scalar_lea.vmem %s1, 18
  %19 = vst.msk [vmem:[%s18] sm:$0x3] %vm17, %v16

// kernel: transformer_forward.1
$region0: #{transformer_forward.1}
  #allocation0 [shape = 'u32[]', space=smem, size = 0x4, offset = 0x4, fixed_abs, tag = 'smem constant byte address 0x4 - core index']
  #allocation1 [shape = 'u32[144,128]{1,0:T(1,128)}', space=vmem, size = 0x12000, scoped, tag = 'internal scratch']
  %s0 = inlined_call_operand.vmem [shape: f32[352,128], index: 0, kind: input, shape index: {}]
  %s1 = inlined_call_operand.vmem [shape: f32[248,128], index: 1, kind: input, shape index: {}]
  %s2 = inlined_call_operand.vmem [shape: f32[16,4], index: 2, kind: input, shape index: {}]
  %s3 = inlined_call_operand.vmem [shape: f32[20,1], index: 3, kind: input, shape index: {}]
  %s4 = inlined_call_operand.vmem [shape: f32[2,1], index: 4, kind: output, shape index: {}]
  %s5 = sld [smem:[#allocation0]]
  $region26: #{transformer_forward.1} parent=0
    _
  %s7 = ssub.s32 1, %s5
  %s8 = scalar_select 0, %s7, %s5
  // Predicated region
  $region2: #{transformer_forward.1} parent=0 // pred_check
    _
  $region3: #{transformer_forward.1} parent=0 // pred_check_branch
    %10 = sbr.rel (0) target = $region5
  $region4: #{transformer_forward.1} parent=0 // pred_region
    _
  $region5: #{transformer_forward.1} parent=0 // pred_fallthru
    _
  // Predicated region
  $region6: #{transformer_forward.1} parent=0 // pred_check
    _
  $region7: #{transformer_forward.1} parent=0 // pred_check_branch
    %12 = sbr.rel (0) target = $region9
  $region8: #{transformer_forward.1} parent=0 // pred_region
    _
  $region9: #{transformer_forward.1} parent=0 // pred_fallthru
    _
  // Predicated region
  $region10: #{transformer_forward.1} parent=0 // pred_check
    _
  $region11: #{transformer_forward.1} parent=0 // pred_check_branch
    %14 = sbr.rel (0) target = $region13
  $region12: #{transformer_forward.1} parent=0 // pred_region
    _
  $region13: #{transformer_forward.1} parent=0 // pred_fallthru
    _
  // Predicated region
  $region14: #{transformer_forward.1} parent=0 // pred_check
    _
  $region15: #{transformer_forward.1} parent=0 // pred_check_branch
    %16 = sbr.rel (0) target = $region17
  $region16: #{transformer_forward.1} parent=0 // pred_region
    _
  $region17: #{transformer_forward.1} parent=0 // pred_fallthru
    _
  %v17 = vld [vmem:[%s2] sm:$0xff]
  %v18 = vld [vmem:[%s2 + $0x8] sm:$0xff]
  %v19 = vld [vmem:[%s0] sm:$0xf]
  %v20 = vld [vmem:[%s1] sm:$0xff]
  %v21 = vld [vmem:[%s1 + $0x8] sm:$0xff]
  %vm22 = vcmask 31744
  %v24 = vsel %vm22, %v17, 0
  %v27 = vsel %vm22, %v18, 0
  %vm29 = vcmask 1043456
  %v31 = vsel %vm29, %v19, 0
  %33 = vmatprep.subr.mxu0 0.0
  %34 = vmatpush1.msra.mxu0 %v31
  %35 = vmatprep.subr.mxu0 0.0
  %36 = vmatpush1.msra.mxu0 0.0
  %37 = vmatprep.subr.mxu0 0.0
  %38 = vmatpush1.msra.mxu0 0.0
  %39 = vmatprep.subr.mxu0 0.0
  %40 = vmatpush1.msra.mxu0 0.0
  %41 = vmatprep.subr.mxu0 0.0
  %42 = vmatpush1.msra.mxu0 0.0
  %43 = vmatprep.subr.mxu0 0.0
  %44 = vmatpush1.msra.mxu0 0.0
  %45 = vmatprep.subr.mxu0 0.0
  %46 = vmatpush1.msra.mxu0 0.0
  %47 = vmatprep.subr.mxu0 0.0
  %48 = vmatpush1.msra.mxu0 0.0
  %49 = vmatprep.subr.mxu0 0.0
  %50 = vmatpush1.msra.mxu0 0.0
  %51 = vmatprep.subr.mxu0 0.0
  %52 = vmatpush1.msra.mxu0 0.0
  %53 = vmatprep.subr.mxu0 0.0
  %54 = vmatpush1.msra.mxu0 0.0
  %55 = vmatprep.subr.mxu0 0.0
  %56 = vmatpush1.msra.mxu0 0.0
  %57 = vmatprep.subr.mxu0 0.0
  %58 = vmatpush1.msra.mxu0 0.0
  %59 = vmatprep.subr.mxu0 0.0
  %60 = vmatpush1.msra.mxu0 0.0
  %61 = vmatprep.subr.mxu0 0.0
  %62 = vmatpush1.msra.mxu0 0.0
  %63 = vmatprep.subr.mxu0 0.0
  %64 = vmatpush1.msra.mxu0 0.0
  %65 = vmatprep.subr.mxu0 0.0
  %66 = vmatpush1.msra.mxu0 0.0
  %67 = vmatprep.subr.mxu0 0.0
  %68 = vmatpush1.msra.mxu0 0.0
  %69 = vmatprep.subr.mxu0 0.0
  %70 = vmatpush1.msra.mxu0 0.0
  %71 = vmatprep.subr.mxu0 0.0
  %72 = vmatpush1.msra.mxu0 0.0
  %73 = vmatprep.subr.mxu0 0.0
  %74 = vmatpush1.msra.mxu0 0.0
  %75 = vmatprep.subr.mxu0 0.0
  %76 = vmatpush1.msra.mxu0 0.0
  %77 = vmatprep.subr.mxu0 0.0
  %78 = vmatpush1.msra.mxu0 0.0
  %79 = vmatprep.subr.mxu0 0.0
  %80 = vmatpush1.msra.mxu0 0.0
  %81 = vmatprep.subr.mxu0 0.0
  %82 = vmatpush1.msra.mxu0 0.0
  %83 = vmatprep.subr.mxu0 0.0
  %84 = vmatpush1.msra.mxu0 0.0
  %85 = vmatprep.subr.mxu0 0.0
  %86 = vmatpush1.msra.mxu0 0.0
  %87 = vmatprep.subr.mxu0 0.0
  %88 = vmatpush1.msra.mxu0 0.0
  %89 = vmatprep.subr.mxu0 0.0
  %90 = vmatpush1.msra.mxu0 0.0
  %91 = vmatprep.subr.mxu0 0.0
  %92 = vmatpush1.msra.mxu0 0.0
  %93 = vmatprep.subr.mxu0 0.0
  %94 = vmatpush1.msra.mxu0 0.0
  %95 = vmatprep.subr.mxu0 0.0
  %96 = vmatpush1.msra.mxu0 0.0
  %97 = vmatprep.mubr.f32.mxu0 0.0
  %98 = vmatmul.mubr.f32.gmra.mrb[0].mxu0 %v24
  %v99 = vpop.f32.mrb[0].mxu0
  %v100 = vadd.f32 %v20, %v99
  %v101 = vpop.f32.mrb[0].mxu0
  %102 = vmatprep.mubr.f32.mxu0 0.0
  %103 = vmatmul.mubr.f32.gmra.mrb[0].mxu0 %v27
  %v104 = vpop.f32.mrb[0].mxu0
  %v105 = vadd.f32 %v21, %v104
  %v106 = vpop.f32.mrb[0].mxu0
  %107 = vdwg.mxu0
  %v108 = vld [vmem:[%s0 + $0x8] sm:$0xff]
  %v109 = vld [vmem:[%s0 + $0x10] sm:$0xff]
  %v110 = vld [vmem:[%s0 + $0x18] sm:$0xff]
  %v111 = vld [vmem:[%s0 + $0x20] sm:$0xff]
  %v112 = vld [vmem:[%s1 + $0x30] sm:$0x1]
  %v113 = vlaneseq
  %v114 = vshrl.u32 %v113, 7
  %v115 = vsub.s32 0, %v114
  %v116 = vrot.slane %v112, %v115
  %vm117 = vcmask 261120
  %v119 = vsel %vm117, %v100, 0
  %v122 = vsel %vm117, %v105, 0
  %124 = vmatprep.subr.mxu0 0.0
  %125 = vmatpush1.msra.mxu0 %v108
  %126 = vmatprep.subr.mxu0 0.0
  %127 = vmatpush1.msra.mxu0 %v109
  %128 = vmatprep.subr.mxu0 0.0
  %129 = vmatpush1.msra.mxu0 %v110
  %130 = vmatprep.subr.mxu0 0.0
  %131 = vmatpush1.msra.mxu0 %v111
  %132 = vmatprep.subr.mxu0 0.0
  %133 = vmatpush1.msra.mxu0 0.0
  %134 = vmatprep.subr.mxu0 0.0
  %135 = vmatpush1.msra.mxu0 0.0
  %136 = vmatprep.subr.mxu0 0.0
  %137 = vmatpush1.msra.mxu0 0.0
  %138 = vmatprep.subr.mxu0 0.0
  %139 = vmatpush1.msra.mxu0 0.0
  %140 = vmatprep.subr.mxu0 0.0
  %141 = vmatpush1.msra.mxu0 0.0
  %142 = vmatprep.subr.mxu0 0.0
  %143 = vmatpush1.msra.mxu0 0.0
  %144 = vmatprep.subr.mxu0 0.0
  %145 = vmatpush1.msra.mxu0 0.0
  %146 = vmatprep.subr.mxu0 0.0
  %147 = vmatpush1.msra.mxu0 0.0
  %148 = vmatprep.subr.mxu0 0.0
  %149 = vmatpush1.msra.mxu0 0.0
  %150 = vmatprep.subr.mxu0 0.0
  %151 = vmatpush1.msra.mxu0 0.0
  %152 = vmatprep.subr.mxu0 0.0
  %153 = vmatpush1.msra.mxu0 0.0
  %154 = vmatprep.subr.mxu0 0.0
  %155 = vmatpush1.msra.mxu0 0.0
  %156 = vmatprep.subr.mxu0 0.0
  %157 = vmatpush1.msra.mxu0 0.0
  %158 = vmatprep.subr.mxu0 0.0
  %159 = vmatpush1.msra.mxu0 0.0
  %160 = vmatprep.subr.mxu0 0.0
  %161 = vmatpush1.msra.mxu0 0.0
  %162 = vmatprep.subr.mxu0 0.0
  %163 = vmatpush1.msra.mxu0 0.0
  %164 = vmatprep.subr.mxu0 0.0
  %165 = vmatpush1.msra.mxu0 0.0
  %166 = vmatprep.subr.mxu0 0.0
  %167 = vmatpush1.msra.mxu0 0.0
  %168 = vmatprep.subr.mxu0 0.0
  %169 = vmatpush1.msra.mxu0 0.0
  %170 = vmatprep.subr.mxu0 0.0
  %171 = vmatpush1.msra.mxu0 0.0
  %172 = vmatprep.subr.mxu0 0.0
  %173 = vmatpush1.msra.mxu0 0.0
  %174 = vmatprep.subr.mxu0 0.0
  %175 = vmatpush1.msra.mxu0 0.0
  %176 = vmatprep.subr.mxu0 0.0
  %177 = vmatpush1.msra.mxu0 0.0
  %178 = vmatprep.subr.mxu0 0.0
  %179 = vmatpush1.msra.mxu0 0.0
  %180 = vmatprep.subr.mxu0 0.0
  %181 = vmatpush1.msra.mxu0 0.0
  %182 = vmatprep.subr.mxu0 0.0
  %183 = vmatpush1.msra.mxu0 0.0
  %184 = vmatprep.subr.mxu0 0.0
  %185 = vmatpush1.msra.mxu0 0.0
  %186 = vmatprep.subr.mxu0 0.0
  %187 = vmatpush1.msra.mxu0 0.0
  %188 = vmatprep.mubr.f32.mxu0 0.0
  %189 = vmatmul.mubr.f32.gmra.mrb[0].mxu0 %v119
  %v190 = vpop.f32.mrb[0].mxu0
  %v191 = vadd.f32 %v116, %v190
  %v192 = vpop.f32.mrb[0].mxu0
  %193 = vmatprep.mubr.f32.mxu0 0.0
  %194 = vmatmul.mubr.f32.gmra.mrb[0].mxu0 %v122
  %v195 = vpop.f32.mrb[0].mxu0
  %v196 = vadd.f32 %v116, %v195
  %v197 = vpop.f32.mrb[0].mxu0
  %198 = vdwg.mxu0
  %201 = vrot.lane.b32.xlu0 %v191, 120
  %v202 = vpop.permute.xlu0 %201
  %203 = vrot.lane.b32.xlu0 %v196, 120
  %v204 = vpop.permute.xlu0 %203
  %vm205 = vcmask 64512
  %v206 = vsel %vm205, %v191, 0
  %v208 = vsel %vm205, %v196, 0
  %v210 = vsel %vm205, %v202, 0
  %v212 = vsel %vm205, %v204, 0
  %214 = vmatprep.subr.mxu0 0.0
  %215 = vmatpush1.xpose.msra.mxu0 %v210
  %216 = vmatprep.subr.mxu0 0.0
  %217 = vmatpush1.xpose.msra.mxu0 %v212
  %218 = vmatprep.subr.mxu0 0.0
  %219 = vmatpush1.xpose.msra.mxu0 0.0
  %220 = vmatprep.subr.mxu0 0.0
  %221 = vmatpush1.xpose.msra.mxu0 0.0
  %222 = vmatprep.subr.mxu0 0.0
  %223 = vmatpush1.xpose.msra.mxu0 0.0
  %224 = vmatprep.subr.mxu0 0.0
  %225 = vmatpush1.xpose.msra.mxu0 0.0
  %226 = vmatprep.subr.mxu0 0.0
  %227 = vmatpush1.xpose.msra.mxu0 0.0
  %228 = vmatprep.subr.mxu0 0.0
  %229 = vmatpush1.xpose.msra.mxu0 0.0
  %230 = vmatprep.subr.mxu0 0.0
  %231 = vmatpush1.xpose.msra.mxu0 0.0
  %232 = vmatprep.subr.mxu0 0.0
  %233 = vmatpush1.xpose.msra.mxu0 0.0
  %234 = vmatprep.subr.mxu0 0.0
  %235 = vmatpush1.xpose.msra.mxu0 0.0
  %236 = vmatprep.subr.mxu0 0.0
  %237 = vmatpush1.xpose.msra.mxu0 0.0
  %238 = vmatprep.subr.mxu0 0.0
  %239 = vmatpush1.xpose.msra.mxu0 0.0
  %240 = vmatprep.subr.mxu0 0.0
  %241 = vmatpush1.xpose.msra.mxu0 0.0
  %242 = vmatprep.subr.mxu0 0.0
  %243 = vmatpush1.xpose.msra.mxu0 0.0
  %244 = vmatprep.subr.mxu0 0.0
  %245 = vmatpush1.xpose.msra.mxu0 0.0
  %246 = vmatprep.subr.mxu0 0.0
  %247 = vmatpush1.xpose.msra.mxu0 0.0
  %248 = vmatprep.subr.mxu0 0.0
  %249 = vmatpush1.xpose.msra.mxu0 0.0
  %250 = vmatprep.subr.mxu0 0.0
  %251 = vmatpush1.xpose.msra.mxu0 0.0
  %252 = vmatprep.subr.mxu0 0.0
  %253 = vmatpush1.xpose.msra.mxu0 0.0
  %254 = vmatprep.subr.mxu0 0.0
  %255 = vmatpush1.xpose.msra.mxu0 0.0
  %256 = vmatprep.subr.mxu0 0.0
  %257 = vmatpush1.xpose.msra.mxu0 0.0
  %258 = vmatprep.subr.mxu0 0.0
  %259 = vmatpush1.xpose.msra.mxu0 0.0
  %260 = vmatprep.subr.mxu0 0.0
  %261 = vmatpush1.xpose.msra.mxu0 0.0
  %262 = vmatprep.subr.mxu0 0.0
  %263 = vmatpush1.xpose.msra.mxu0 0.0
  %264 = vmatprep.subr.mxu0 0.0
  %265 = vmatpush1.xpose.msra.mxu0 0.0
  %266 = vmatprep.subr.mxu0 0.0
  %267 = vmatpush1.xpose.msra.mxu0 0.0
  %268 = vmatprep.subr.mxu0 0.0
  %269 = vmatpush1.xpose.msra.mxu0 0.0
  %270 = vmatprep.subr.mxu0 0.0
  %271 = vmatpush1.xpose.msra.mxu0 0.0
  %272 = vmatprep.subr.mxu0 0.0
  %273 = vmatpush1.xpose.msra.mxu0 0.0
  %274 = vmatprep.subr.mxu0 0.0
  %275 = vmatpush1.xpose.msra.mxu0 0.0
  %276 = vmatprep.subr.mxu0 0.0
  %277 = vmatpush1.xpose.msra.mxu0 0.0
  %278 = vmatprep.mubr.f32.mxu0 0.0
  %279 = vmatmul.mubr.f32.gmra.mrb[0].mxu0 %v206
  %v280 = vpop.f32.mrb[0].mxu0
  %v281 = vadd.f32 0.0, %v280
  %v282 = vpop.f32.mrb[0].mxu0
  %283 = vmatprep.mubr.f32.mxu0 0.0
  %284 = vmatmul.mubr.f32.gmra.mrb[0].mxu0 %v208
  %v285 = vpop.f32.mrb[0].mxu0
  %v286 = vadd.f32 0.0, %v285
  %v287 = vpop.f32.mrb[0].mxu0
  %288 = vdwg.mxu0
  %v289 = vmul.f32 %v281, 0.35355338
  %v290 = vmul.f32 %v286, 0.35355338
  %v291 = vld [vmem:[%s1 + $0x68] sm:$0xff]
  %v292 = vld [vmem:[%s1 + $0x70] sm:$0xff]
  %v293 = vadd.f32 %v289, %v291
  %v294 = vadd.f32 %v290, %v292
  %vm295 = vcmask 130048
  %v296 = vsel %vm295, %v293, -inf
  %297 = vmax.xlane.f32.xlu0 %v296
  %v298 = vpop.xlane.xlu0 %297
  %v299 = vsel %vm295, %v294, -inf
  %300 = vmax.xlane.f32.xlu0 %v299
  %v301 = vpop.xlane.xlu0 %300
  %v302 = vsub.f32 %v293, %v298
  %v303 = vsub.f32 %v294, %v301
  %v304 = vmul.f32 %v302, 1.442695
  %v305 = vpow.pop %v304
  %v306 = vmul.f32 %v303, 1.442695
  %v307 = vpow.pop %v306
  %v308 = vsel %vm295, %v305, 0.0
  %309 = vadd.xlane.f32.xlu0 %v308
  %v310 = vpop.xlane.xlu0 %309
  %v311 = vsel %vm295, %v307, 0.0
  %312 = vadd.xlane.f32.xlu0 %v311
  %v313 = vpop.xlane.xlu0 %312
  %v314 = vrcp.pop %v310
  %v315 = vrcp.pop %v313
  %v316 = vmul.f32 %v305, %v314
  %v317 = vmul.f32 %v307, %v315
  %318 = vrot.lane.b32.xlu0 %v191, 112
  %v319 = vpop.permute.xlu0 %318
  %320 = vrot.lane.b32.xlu0 %v196, 112
  %v321 = vpop.permute.xlu0 %320
  %v325 = vsel %vm295, %v316, 0
  %v328 = vsel %vm295, %v317, 0
  %330 = vmatprep.subr.mxu0 0.0
  %331 = vmatpush1.msra.mxu0 %v319
  %332 = vmatprep.subr.mxu0 0.0
  %333 = vmatpush1.msra.mxu0 %v321
  %334 = vmatprep.subr.mxu0 0.0
  %335 = vmatpush1.msra.mxu0 0.0
  %336 = vmatprep.subr.mxu0 0.0
  %337 = vmatpush1.msra.mxu0 0.0
  %338 = vmatprep.subr.mxu0 0.0
  %339 = vmatpush1.msra.mxu0 0.0
  %340 = vmatprep.subr.mxu0 0.0
  %341 = vmatpush1.msra.mxu0 0.0
  %342 = vmatprep.subr.mxu0 0.0
  %343 = vmatpush1.msra.mxu0 0.0
  %344 = vmatprep.subr.mxu0 0.0
  %345 = vmatpush1.msra.mxu0 0.0
  %346 = vmatprep.subr.mxu0 0.0
  %347 = vmatpush1.msra.mxu0 0.0
  %348 = vmatprep.subr.mxu0 0.0
  %349 = vmatpush1.msra.mxu0 0.0
  %350 = vmatprep.subr.mxu0 0.0
  %351 = vmatpush1.msra.mxu0 0.0
  %352 = vmatprep.subr.mxu0 0.0
  %353 = vmatpush1.msra.mxu0 0.0
  %354 = vmatprep.subr.mxu0 0.0
  %355 = vmatpush1.msra.mxu0 0.0
  %356 = vmatprep.subr.mxu0 0.0
  %357 = vmatpush1.msra.mxu0 0.0
  %358 = vmatprep.subr.mxu0 0.0
  %359 = vmatpush1.msra.mxu0 0.0
  %360 = vmatprep.subr.mxu0 0.0
  %361 = vmatpush1.msra.mxu0 0.0
  %362 = vmatprep.subr.mxu0 0.0
  %363 = vmatpush1.msra.mxu0 0.0
  %364 = vmatprep.subr.mxu0 0.0
  %365 = vmatpush1.msra.mxu0 0.0
  %366 = vmatprep.subr.mxu0 0.0
  %367 = vmatpush1.msra.mxu0 0.0
  %368 = vmatprep.subr.mxu0 0.0
  %369 = vmatpush1.msra.mxu0 0.0
  %370 = vmatprep.subr.mxu0 0.0
  %371 = vmatpush1.msra.mxu0 0.0
  %372 = vmatprep.subr.mxu0 0.0
  %373 = vmatpush1.msra.mxu0 0.0
  %374 = vmatprep.subr.mxu0 0.0
  %375 = vmatpush1.msra.mxu0 0.0
  %376 = vmatprep.subr.mxu0 0.0
  %377 = vmatpush1.msra.mxu0 0.0
  %378 = vmatprep.subr.mxu0 0.0
  %379 = vmatpush1.msra.mxu0 0.0
  %380 = vmatprep.subr.mxu0 0.0
  %381 = vmatpush1.msra.mxu0 0.0
  %382 = vmatprep.subr.mxu0 0.0
  %383 = vmatpush1.msra.mxu0 0.0
  %384 = vmatprep.subr.mxu0 0.0
  %385 = vmatpush1.msra.mxu0 0.0
  %386 = vmatprep.subr.mxu0 0.0
  %387 = vmatpush1.msra.mxu0 0.0
  %388 = vmatprep.subr.mxu0 0.0
  %389 = vmatpush1.msra.mxu0 0.0
  %390 = vmatprep.subr.mxu0 0.0
  %391 = vmatpush1.msra.mxu0 0.0
  %392 = vmatprep.subr.mxu0 0.0
  %393 = vmatpush1.msra.mxu0 0.0
  %394 = vmatprep.mubr.f32.mxu0 0.0
  %395 = vmatmul.mubr.f32.gmra.mrb[0].mxu0 %v325
  %v396 = vpop.f32.mrb[0].mxu0
  %v397 = vadd.f32 0.0, %v396
  %v398 = vpop.f32.mrb[0].mxu0
  %399 = vmatprep.mubr.f32.mxu0 0.0
  %400 = vmatmul.mubr.f32.gmra.mrb[0].mxu0 %v328
  %v401 = vpop.f32.mrb[0].mxu0
  %v402 = vadd.f32 0.0, %v401
  %v403 = vpop.f32.mrb[0].mxu0
  %404 = vdwg.mxu0
  %v405 = vld [vmem:[%s0 + $0x28] sm:$0xff]
  %v407 = vsel %vm205, %v397, 0
  %v410 = vsel %vm205, %v402, 0
  %412 = vmatprep.subr.mxu0 0.0
  %413 = vmatpush1.msra.mxu0 %v405
  %414 = vmatprep.subr.mxu0 0.0
  %415 = vmatpush1.msra.mxu0 0.0
  %416 = vmatprep.subr.mxu0 0.0
  %417 = vmatpush1.msra.mxu0 0.0
  %418 = vmatprep.subr.mxu0 0.0
  %419 = vmatpush1.msra.mxu0 0.0
  %420 = vmatprep.subr.mxu0 0.0
  %421 = vmatpush1.msra.mxu0 0.0
  %422 = vmatprep.subr.mxu0 0.0
  %423 = vmatpush1.msra.mxu0 0.0
  %424 = vmatprep.subr.mxu0 0.0
  %425 = vmatpush1.msra.mxu0 0.0
  %426 = vmatprep.subr.mxu0 0.0
  %427 = vmatpush1.msra.mxu0 0.0
  %428 = vmatprep.subr.mxu0 0.0
  %429 = vmatpush1.msra.mxu0 0.0
  %430 = vmatprep.subr.mxu0 0.0
  %431 = vmatpush1.msra.mxu0 0.0
  %432 = vmatprep.subr.mxu0 0.0
  %433 = vmatpush1.msra.mxu0 0.0
  %434 = vmatprep.subr.mxu0 0.0
  %435 = vmatpush1.msra.mxu0 0.0
  %436 = vmatprep.subr.mxu0 0.0
  %437 = vmatpush1.msra.mxu0 0.0
  %438 = vmatprep.subr.mxu0 0.0
  %439 = vmatpush1.msra.mxu0 0.0
  %440 = vmatprep.subr.mxu0 0.0
  %441 = vmatpush1.msra.mxu0 0.0
  %442 = vmatprep.subr.mxu0 0.0
  %443 = vmatpush1.msra.mxu0 0.0
  %444 = vmatprep.subr.mxu0 0.0
  %445 = vmatpush1.msra.mxu0 0.0
  %446 = vmatprep.subr.mxu0 0.0
  %447 = vmatpush1.msra.mxu0 0.0
  %448 = vmatprep.subr.mxu0 0.0
  %449 = vmatpush1.msra.mxu0 0.0
  %450 = vmatprep.subr.mxu0 0.0
  %451 = vmatpush1.msra.mxu0 0.0
  %452 = vmatprep.subr.mxu0 0.0
  %453 = vmatpush1.msra.mxu0 0.0
  %454 = vmatprep.subr.mxu0 0.0
  %455 = vmatpush1.msra.mxu0 0.0
  %456 = vmatprep.subr.mxu0 0.0
  %457 = vmatpush1.msra.mxu0 0.0
  %458 = vmatprep.subr.mxu0 0.0
  %459 = vmatpush1.msra.mxu0 0.0
  %460 = vmatprep.subr.mxu0 0.0
  %461 = vmatpush1.msra.mxu0 0.0
  %462 = vmatprep.subr.mxu0 0.0
  %463 = vmatpush1.msra.mxu0 0.0
  %464 = vmatprep.subr.mxu0 0.0
  %465 = vmatpush1.msra.mxu0 0.0
  %466 = vmatprep.subr.mxu0 0.0
  %467 = vmatpush1.msra.mxu0 0.0
  %468 = vmatprep.subr.mxu0 0.0
  %469 = vmatpush1.msra.mxu0 0.0
  %470 = vmatprep.subr.mxu0 0.0
  %471 = vmatpush1.msra.mxu0 0.0
  %472 = vmatprep.subr.mxu0 0.0
  %473 = vmatpush1.msra.mxu0 0.0
  %474 = vmatprep.subr.mxu0 0.0
  %475 = vmatpush1.msra.mxu0 0.0
  %476 = vmatprep.mubr.f32.mxu0 0.0
  %477 = vmatmul.mubr.f32.gmra.mrb[0].mxu0 %v407
  %v478 = vpop.f32.mrb[0].mxu0
  %v479 = vadd.f32 0.0, %v478
  %v480 = vpop.f32.mrb[0].mxu0
  %481 = vmatprep.mubr.f32.mxu0 0.0
  %482 = vmatmul.mubr.f32.gmra.mrb[0].mxu0 %v410
  %v483 = vpop.f32.mrb[0].mxu0
  %v484 = vadd.f32 0.0, %v483
  %v485 = vpop.f32.mrb[0].mxu0
  %486 = vdwg.mxu0
  %v487 = vadd.f32 %v100, %v479
  %v488 = vadd.f32 %v105, %v484
  %v489 = vsel %vm117, %v487, 0.0
  %490 = vadd.xlane.f32.xlu0 %v489
  %v491 = vpop.xlane.xlu0 %490
  %v492 = vsel %vm117, %v488, 0.0
  %493 = vadd.xlane.f32.xlu0 %v492
  %v494 = vpop.xlane.xlu0 %493
  %v495 = vrcp.pop 32.0
  %v496 = vmul.f32 %v491, %v495
  %v497 = vmul.f32 %v494, %v495
  %v498 = vsub.f32 %v487, %v496
  %v499 = vsub.f32 %v488, %v497
  %v500 = vmul.f32 %v498, %v498
  %v501 = vmul.f32 %v499, %v499
  %v502 = vsel %vm117, %v500, 0.0
  %503 = vadd.xlane.f32.xlu0 %v502
  %v504 = vpop.xlane.xlu0 %503
  %v505 = vsel %vm117, %v501, 0.0
  %506 = vadd.xlane.f32.xlu0 %v505
  %v507 = vpop.xlane.xlu0 %506
  %v508 = vmul.f32 %v504, %v495
  %v509 = vmul.f32 %v507, %v495
  %v510 = vadd.f32 %v508, 1e-05
  %v511 = vadd.f32 %v509, 1e-05
  %v512 = vrsqrt.pop %v510
  %v513 = vrsqrt.pop %v511
  %v514 = vmul.f32 %v498, %v512
  %v515 = vmul.f32 %v499, %v513
  %v516 = vld [vmem:[%s1 + $0xa8] sm:$0x1]
  %v517 = vlaneseq
  %v518 = vshrl.u32 %v517, 7
  %v519 = vsub.s32 0, %v518
  %v520 = vrot.slane %v516, %v519
  %v521 = vmul.f32 %v514, %v520
  %v522 = vmul.f32 %v515, %v520
  %v523 = vld [vmem:[%s1 + $0xb0] sm:$0x1]
  %v524 = vlaneseq
  %v525 = vshrl.u32 %v524, 7
  %v526 = vsub.s32 0, %v525
  %v527 = vrot.slane %v523, %v526
  %v528 = vadd.f32 %v521, %v527
  %v529 = vadd.f32 %v522, %v527
  %v530 = vld [vmem:[%s0 + $0x30] sm:$0xff]
  %v531 = vld [vmem:[%s0 + $0x38] sm:$0xff]
  %v532 = vld [vmem:[%s0 + $0x40] sm:$0xff]
  %v533 = vld [vmem:[%s0 + $0x48] sm:$0xff]
  %v535 = vsel %vm117, %v528, 0
  %v538 = vsel %vm117, %v529, 0
  %540 = vmatprep.subr.mxu0 0.0
  %541 = vmatpush1.msra.mxu0 %v530
  %542 = vmatprep.subr.mxu0 0.0
  %543 = vmatpush1.msra.mxu0 %v531
  %544 = vmatprep.subr.mxu0 0.0
  %545 = vmatpush1.msra.mxu0 %v532
  %546 = vmatprep.subr.mxu0 0.0
  %547 = vmatpush1.msra.mxu0 %v533
  %548 = vmatprep.subr.mxu0 0.0
  %549 = vmatpush1.msra.mxu0 0.0
  %550 = vmatprep.subr.mxu0 0.0
  %551 = vmatpush1.msra.mxu0 0.0
  %552 = vmatprep.subr.mxu0 0.0
  %553 = vmatpush1.msra.mxu0 0.0
  %554 = vmatprep.subr.mxu0 0.0
  %555 = vmatpush1.msra.mxu0 0.0
  %556 = vmatprep.subr.mxu0 0.0
  %557 = vmatpush1.msra.mxu0 0.0
  %558 = vmatprep.subr.mxu0 0.0
  %559 = vmatpush1.msra.mxu0 0.0
  %560 = vmatprep.subr.mxu0 0.0
  %561 = vmatpush1.msra.mxu0 0.0
  %562 = vmatprep.subr.mxu0 0.0
  %563 = vmatpush1.msra.mxu0 0.0
  %564 = vmatprep.subr.mxu0 0.0
  %565 = vmatpush1.msra.mxu0 0.0
  %566 = vmatprep.subr.mxu0 0.0
  %567 = vmatpush1.msra.mxu0 0.0
  %568 = vmatprep.subr.mxu0 0.0
  %569 = vmatpush1.msra.mxu0 0.0
  %570 = vmatprep.subr.mxu0 0.0
  %571 = vmatpush1.msra.mxu0 0.0
  %572 = vmatprep.subr.mxu0 0.0
  %573 = vmatpush1.msra.mxu0 0.0
  %574 = vmatprep.subr.mxu0 0.0
  %575 = vmatpush1.msra.mxu0 0.0
  %576 = vmatprep.subr.mxu0 0.0
  %577 = vmatpush1.msra.mxu0 0.0
  %578 = vmatprep.subr.mxu0 0.0
  %579 = vmatpush1.msra.mxu0 0.0
  %580 = vmatprep.subr.mxu0 0.0
  %581 = vmatpush1.msra.mxu0 0.0
  %582 = vmatprep.subr.mxu0 0.0
  %583 = vmatpush1.msra.mxu0 0.0
  %584 = vmatprep.subr.mxu0 0.0
  %585 = vmatpush1.msra.mxu0 0.0
  %586 = vmatprep.subr.mxu0 0.0
  %587 = vmatpush1.msra.mxu0 0.0
  %588 = vmatprep.subr.mxu0 0.0
  %589 = vmatpush1.msra.mxu0 0.0
  %590 = vmatprep.subr.mxu0 0.0
  %591 = vmatpush1.msra.mxu0 0.0
  %592 = vmatprep.subr.mxu0 0.0
  %593 = vmatpush1.msra.mxu0 0.0
  %594 = vmatprep.subr.mxu0 0.0
  %595 = vmatpush1.msra.mxu0 0.0
  %596 = vmatprep.subr.mxu0 0.0
  %597 = vmatpush1.msra.mxu0 0.0
  %598 = vmatprep.subr.mxu0 0.0
  %599 = vmatpush1.msra.mxu0 0.0
  %600 = vmatprep.subr.mxu0 0.0
  %601 = vmatpush1.msra.mxu0 0.0
  %602 = vmatprep.subr.mxu0 0.0
  %603 = vmatpush1.msra.mxu0 0.0
  %604 = vmatprep.mubr.f32.mxu0 0.0
  %605 = vmatmul.mubr.f32.gmra.mrb[0].mxu0 %v535
  %v606 = vpop.f32.mrb[0].mxu0
  %v607 = vadd.f32 0.0, %v606
  %v608 = vpop.f32.mrb[0].mxu0
  %609 = vmatprep.mubr.f32.mxu0 0.0
  %610 = vmatmul.mubr.f32.gmra.mrb[0].mxu0 %v538
  %v611 = vpop.f32.mrb[0].mxu0
  %v612 = vadd.f32 0.0, %v611
  %v613 = vpop.f32.mrb[0].mxu0
  %614 = vdwg.mxu0
  %v615 = vmax.f32 %v607, 0.0
  %v616 = vmax.f32 %v612, 0.0
  %v617 = vld [vmem:[%s0 + $0x50] sm:$0xff]
  %v618 = vld [vmem:[%s0 + $0x58] sm:$0xff]
  %v619 = vld [vmem:[%s0 + $0x60] sm:$0xff]
  %v620 = vld [vmem:[%s0 + $0x68] sm:$0xff]
  %v621 = vld [vmem:[%s0 + $0x70] sm:$0xff]
  %v622 = vld [vmem:[%s0 + $0x78] sm:$0xff]
  %v623 = vld [vmem:[%s0 + $0x80] sm:$0xff]
  %v624 = vld [vmem:[%s0 + $0x88] sm:$0xff]
  %vm625 = vcmask 523264
  %v627 = vsel %vm625, %v615, 0
  %v630 = vsel %vm625, %v616, 0
  %632 = vmatprep.subr.mxu0 0.0
  %633 = vmatpush1.msra.mxu0 %v617
  %634 = vmatprep.subr.mxu0 0.0
  %635 = vmatpush1.msra.mxu0 %v618
  %636 = vmatprep.subr.mxu0 0.0
  %637 = vmatpush1.msra.mxu0 %v619
  %638 = vmatprep.subr.mxu0 0.0
  %639 = vmatpush1.msra.mxu0 %v620
  %640 = vmatprep.subr.mxu0 0.0
  %641 = vmatpush1.msra.mxu0 %v621
  %642 = vmatprep.subr.mxu0 0.0
  %643 = vmatpush1.msra.mxu0 %v622
  %644 = vmatprep.subr.mxu0 0.0
  %645 = vmatpush1.msra.mxu0 %v623
  %646 = vmatprep.subr.mxu0 0.0
  %647 = vmatpush1.msra.mxu0 %v624
  %648 = vmatprep.subr.mxu0 0.0
  %649 = vmatpush1.msra.mxu0 0.0
  %650 = vmatprep.subr.mxu0 0.0
  %651 = vmatpush1.msra.mxu0 0.0
  %652 = vmatprep.subr.mxu0 0.0
  %653 = vmatpush1.msra.mxu0 0.0
  %654 = vmatprep.subr.mxu0 0.0
  %655 = vmatpush1.msra.mxu0 0.0
  %656 = vmatprep.subr.mxu0 0.0
  %657 = vmatpush1.msra.mxu0 0.0
  %658 = vmatprep.subr.mxu0 0.0
  %659 = vmatpush1.msra.mxu0 0.0
  %660 = vmatprep.subr.mxu0 0.0
  %661 = vmatpush1.msra.mxu0 0.0
  %662 = vmatprep.subr.mxu0 0.0
  %663 = vmatpush1.msra.mxu0 0.0
  %664 = vmatprep.subr.mxu0 0.0
  %665 = vmatpush1.msra.mxu0 0.0
  %666 = vmatprep.subr.mxu0 0.0
  %667 = vmatpush1.msra.mxu0 0.0
  %668 = vmatprep.subr.mxu0 0.0
  %669 = vmatpush1.msra.mxu0 0.0
  %670 = vmatprep.subr.mxu0 0.0
  %671 = vmatpush1.msra.mxu0 0.0
  %672 = vmatprep.subr.mxu0 0.0
  %673 = vmatpush1.msra.mxu0 0.0
  %674 = vmatprep.subr.mxu0 0.0
  %675 = vmatpush1.msra.mxu0 0.0
  %676 = vmatprep.subr.mxu0 0.0
  %677 = vmatpush1.msra.mxu0 0.0
  %678 = vmatprep.subr.mxu0 0.0
  %679 = vmatpush1.msra.mxu0 0.0
  %680 = vmatprep.subr.mxu0 0.0
  %681 = vmatpush1.msra.mxu0 0.0
  %682 = vmatprep.subr.mxu0 0.0
  %683 = vmatpush1.msra.mxu0 0.0
  %684 = vmatprep.subr.mxu0 0.0
  %685 = vmatpush1.msra.mxu0 0.0
  %686 = vmatprep.subr.mxu0 0.0
  %687 = vmatpush1.msra.mxu0 0.0
  %688 = vmatprep.subr.mxu0 0.0
  %689 = vmatpush1.msra.mxu0 0.0
  %690 = vmatprep.subr.mxu0 0.0
  %691 = vmatpush1.msra.mxu0 0.0
  %692 = vmatprep.subr.mxu0 0.0
  %693 = vmatpush1.msra.mxu0 0.0
  %694 = vmatprep.subr.mxu0 0.0
  %695 = vmatpush1.msra.mxu0 0.0
  %696 = vmatprep.mubr.f32.mxu0 0.0
  %697 = vmatmul.mubr.f32.gmra.mrb[0].mxu0 %v627
  %v698 = vpop.f32.mrb[0].mxu0
  %v699 = vadd.f32 %v528, %v698
  %v700 = vpop.f32.mrb[0].mxu0
  %701 = vmatprep.mubr.f32.mxu0 0.0
  %702 = vmatmul.mubr.f32.gmra.mrb[0].mxu0 %v630
  %v703 = vpop.f32.mrb[0].mxu0
  %v704 = vadd.f32 %v529, %v703
  %v705 = vpop.f32.mrb[0].mxu0
  %706 = vdwg.mxu0
  %v707 = vsel %vm117, %v699, 0.0
  %708 = vadd.xlane.f32.xlu0 %v707
  %v709 = vpop.xlane.xlu0 %708
  %v710 = vsel %vm117, %v704, 0.0
  %711 = vadd.xlane.f32.xlu0 %v710
  %v712 = vpop.xlane.xlu0 %711
  %v713 = vmul.f32 %v709, %v495
  %v714 = vmul.f32 %v712, %v495
  %v715 = vsub.f32 %v699, %v713
  %v716 = vsub.f32 %v704, %v714
  %v717 = vmul.f32 %v715, %v715
  %v718 = vmul.f32 %v716, %v716
  %v719 = vsel %vm117, %v717, 0.0
  %720 = vadd.xlane.f32.xlu0 %v719
  %v721 = vpop.xlane.xlu0 %720
  %v722 = vsel %vm117, %v718, 0.0
  %723 = vadd.xlane.f32.xlu0 %v722
  %v724 = vpop.xlane.xlu0 %723
  %v725 = vmul.f32 %v721, %v495
  %v726 = vmul.f32 %v724, %v495
  %v727 = vadd.f32 %v725, 1e-05
  %v728 = vadd.f32 %v726, 1e-05
  %v729 = vrsqrt.pop %v727
  %v730 = vrsqrt.pop %v728
  %v731 = vmul.f32 %v715, %v729
  %v732 = vmul.f32 %v716, %v730
  %v733 = vld [vmem:[%s1 + $0xb8] sm:$0x1]
  %v734 = vlaneseq
  %v735 = vshrl.u32 %v734, 7
  %v736 = vsub.s32 0, %v735
  %v737 = vrot.slane %v733, %v736
  %v738 = vmul.f32 %v731, %v737
  %v739 = vmul.f32 %v732, %v737
  %v740 = vld [vmem:[%s1 + $0xc0] sm:$0x1]
  %v741 = vlaneseq
  %v742 = vshrl.u32 %v741, 7
  %v743 = vsub.s32 0, %v742
  %v744 = vrot.slane %v740, %v743
  %v745 = vadd.f32 %v738, %v744
  %v746 = vadd.f32 %v739, %v744
  %v747 = vld [vmem:[%s3] sm:$0xff]
  %v748 = vld [vmem:[%s3 + $0x8] sm:$0xff]
  %v749 = vld [vmem:[%s3 + $0x10] sm:$0xf]
  %v750 = vld [vmem:[%s1 + $0x28] sm:$0x1]
  %752 = vset.pattern.permute.xlu0 0
  %753 = vperm.xlu0 %752, %v747
  %v754 = vpop.permute.xlu0 %753
  %757 = vset.pattern.permute.xlu0 0
  %758 = vperm.xlu0 %757, %v748
  %v759 = vpop.permute.xlu0 %758
  %762 = vset.pattern.permute.xlu0 0
  %763 = vperm.xlu0 %762, %v749
  %v764 = vpop.permute.xlu0 %763
  %v766 = vlaneseq
  %v767 = vshrl.u32 %v766, 7
  %v768 = vsub.s32 0, %v767
  %v769 = vrot.slane %v750, %v768
  %v770 = vmul.f32 %v754, %v769
  %v771 = vmul.f32 %v759, %v769
  %v772 = vmul.f32 %v764, %v769
  %v773 = vld [vmem:[%s1 + $0x10] sm:$0xff]
  %v774 = vld [vmem:[%s1 + $0x18] sm:$0xff]
  %v775 = vld [vmem:[%s1 + $0x20] sm:$0xf]
  %v776 = vadd.f32 %v770, %v773
  %v777 = vadd.f32 %v771, %v774
  %v778 = vadd.f32 %v772, %v775
  %v779 = vld [vmem:[%s0 + $0x90] sm:$0xff]
  %v780 = vld [vmem:[%s0 + $0x98] sm:$0xff]
  %v781 = vld [vmem:[%s0 + $0xa0] sm:$0xff]
  %v782 = vld [vmem:[%s0 + $0xa8] sm:$0xff]
  %v783 = vld [vmem:[%s1 + $0x38] sm:$0x1]
  %v784 = vlaneseq
  %v785 = vshrl.u32 %v784, 7
  %v786 = vsub.s32 0, %v785
  %v787 = vrot.slane %v783, %v786
  %v789 = vsel %vm117, %v776, 0
  %v792 = vsel %vm117, %v777, 0
  %v795 = vsel %vm117, %v778, 0
  %797 = vmatprep.subr.mxu0 0.0
  %798 = vmatpush1.msra.mxu0 %v779
  %799 = vmatprep.subr.mxu0 0.0
  %800 = vmatpush1.msra.mxu0 %v780
  %801 = vmatprep.subr.mxu0 0.0
  %802 = vmatpush1.msra.mxu0 %v781
  %803 = vmatprep.subr.mxu0 0.0
  %804 = vmatpush1.msra.mxu0 %v782
  %805 = vmatprep.subr.mxu0 0.0
  %806 = vmatpush1.msra.mxu0 0.0
  %807 = vmatprep.subr.mxu0 0.0
  %808 = vmatpush1.msra.mxu0 0.0
  %809 = vmatprep.subr.mxu0 0.0
  %810 = vmatpush1.msra.mxu0 0.0
  %811 = vmatprep.subr.mxu0 0.0
  %812 = vmatpush1.msra.mxu0 0.0
  %813 = vmatprep.subr.mxu0 0.0
  %814 = vmatpush1.msra.mxu0 0.0
  %815 = vmatprep.subr.mxu0 0.0
  %816 = vmatpush1.msra.mxu0 0.0
  %817 = vmatprep.subr.mxu0 0.0
  %818 = vmatpush1.msra.mxu0 0.0
  %819 = vmatprep.subr.mxu0 0.0
  %820 = vmatpush1.msra.mxu0 0.0
  %821 = vmatprep.subr.mxu0 0.0
  %822 = vmatpush1.msra.mxu0 0.0
  %823 = vmatprep.subr.mxu0 0.0
  %824 = vmatpush1.msra.mxu0 0.0
  %825 = vmatprep.subr.mxu0 0.0
  %826 = vmatpush1.msra.mxu0 0.0
  %827 = vmatprep.subr.mxu0 0.0
  %828 = vmatpush1.msra.mxu0 0.0
  %829 = vmatprep.subr.mxu0 0.0
  %830 = vmatpush1.msra.mxu0 0.0
  %831 = vmatprep.subr.mxu0 0.0
  %832 = vmatpush1.msra.mxu0 0.0
  %833 = vmatprep.subr.mxu0 0.0
  %834 = vmatpush1.msra.mxu0 0.0
  %835 = vmatprep.subr.mxu0 0.0
  %836 = vmatpush1.msra.mxu0 0.0
  %837 = vmatprep.subr.mxu0 0.0
  %838 = vmatpush1.msra.mxu0 0.0
  %839 = vmatprep.subr.mxu0 0.0
  %840 = vmatpush1.msra.mxu0 0.0
  %841 = vmatprep.subr.mxu0 0.0
  %842 = vmatpush1.msra.mxu0 0.0
  %843 = vmatprep.subr.mxu0 0.0
  %844 = vmatpush1.msra.mxu0 0.0
  %845 = vmatprep.subr.mxu0 0.0
  %846 = vmatpush1.msra.mxu0 0.0
  %847 = vmatprep.subr.mxu0 0.0
  %848 = vmatpush1.msra.mxu0 0.0
  %849 = vmatprep.subr.mxu0 0.0
  %850 = vmatpush1.msra.mxu0 0.0
  %851 = vmatprep.subr.mxu0 0.0
  %852 = vmatpush1.msra.mxu0 0.0
  %853 = vmatprep.subr.mxu0 0.0
  %854 = vmatpush1.msra.mxu0 0.0
  %855 = vmatprep.subr.mxu0 0.0
  %856 = vmatpush1.msra.mxu0 0.0
  %857 = vmatprep.subr.mxu0 0.0
  %858 = vmatpush1.msra.mxu0 0.0
  %859 = vmatprep.subr.mxu0 0.0
  %860 = vmatpush1.msra.mxu0 0.0
  %861 = vmatprep.mubr.f32.mxu0 0.0
  %862 = vmatmul.mubr.f32.gmra.mrb[0].mxu0 %v789
  %v863 = vpop.f32.mrb[0].mxu0
  %v864 = vadd.f32 %v787, %v863
  %v865 = vpop.f32.mrb[0].mxu0
  %866 = vmatprep.mubr.f32.mxu0 0.0
  %867 = vmatmul.mubr.f32.gmra.mrb[0].mxu0 %v792
  %v868 = vpop.f32.mrb[0].mxu0
  %v869 = vadd.f32 %v787, %v868
  %v870 = vpop.f32.mrb[0].mxu0
  %871 = vmatprep.mubr.f32.mxu0 0.0
  %872 = vmatmul.mubr.f32.gmra.mrb[0].mxu0 %v795
  %v873 = vpop.f32.mrb[0].mxu0
  %v874 = vadd.f32 %v787, %v873
  %v875 = vpop.f32.mrb[0].mxu0
  %876 = vdwg.mxu0
  %880 = vrot.lane.b32.xlu0 %v864, 120
  %v881 = vpop.permute.xlu0 %880
  %882 = vrot.lane.b32.xlu0 %v869, 120
  %v883 = vpop.permute.xlu0 %882
  %884 = vrot.lane.b32.xlu0 %v874, 120
  %v885 = vpop.permute.xlu0 %884
  %v886 = vsel %vm205, %v864, 0
  %v888 = vsel %vm205, %v869, 0
  %v890 = vsel %vm205, %v874, 0
  %v892 = vsel %vm205, %v881, 0
  %v894 = vsel %vm205, %v883, 0
  %v896 = vsel %vm205, %v885, 0
  %898 = vmatprep.subr.mxu0 0.0
  %899 = vmatpush1.xpose.msra.mxu0 %v892
  %900 = vmatprep.subr.mxu0 0.0
  %901 = vmatpush1.xpose.msra.mxu0 %v894
  %902 = vmatprep.subr.mxu0 0.0
  %903 = vmatpush1.xpose.msra.mxu0 %v896
  %904 = vmatprep.subr.mxu0 0.0
  %905 = vmatpush1.xpose.msra.mxu0 0.0
  %906 = vmatprep.subr.mxu0 0.0
  %907 = vmatpush1.xpose.msra.mxu0 0.0
  %908 = vmatprep.subr.mxu0 0.0
  %909 = vmatpush1.xpose.msra.mxu0 0.0
  %910 = vmatprep.subr.mxu0 0.0
  %911 = vmatpush1.xpose.msra.mxu0 0.0
  %912 = vmatprep.subr.mxu0 0.0
  %913 = vmatpush1.xpose.msra.mxu0 0.0
  %914 = vmatprep.subr.mxu0 0.0
  %915 = vmatpush1.xpose.msra.mxu0 0.0
  %916 = vmatprep.subr.mxu0 0.0
  %917 = vmatpush1.xpose.msra.mxu0 0.0
  %918 = vmatprep.subr.mxu0 0.0
  %919 = vmatpush1.xpose.msra.mxu0 0.0
  %920 = vmatprep.subr.mxu0 0.0
  %921 = vmatpush1.xpose.msra.mxu0 0.0
  %922 = vmatprep.subr.mxu0 0.0
  %923 = vmatpush1.xpose.msra.mxu0 0.0
  %924 = vmatprep.subr.mxu0 0.0
  %925 = vmatpush1.xpose.msra.mxu0 0.0
  %926 = vmatprep.subr.mxu0 0.0
  %927 = vmatpush1.xpose.msra.mxu0 0.0
  %928 = vmatprep.subr.mxu0 0.0
  %929 = vmatpush1.xpose.msra.mxu0 0.0
  %930 = vmatprep.subr.mxu0 0.0
  %931 = vmatpush1.xpose.msra.mxu0 0.0
  %932 = vmatprep.subr.mxu0 0.0
  %933 = vmatpush1.xpose.msra.mxu0 0.0
  %934 = vmatprep.subr.mxu0 0.0
  %935 = vmatpush1.xpose.msra.mxu0 0.0
  %936 = vmatprep.subr.mxu0 0.0
  %937 = vmatpush1.xpose.msra.mxu0 0.0
  %938 = vmatprep.subr.mxu0 0.0
  %939 = vmatpush1.xpose.msra.mxu0 0.0
  %940 = vmatprep.subr.mxu0 0.0
  %941 = vmatpush1.xpose.msra.mxu0 0.0
  %942 = vmatprep.subr.mxu0 0.0
  %943 = vmatpush1.xpose.msra.mxu0 0.0
  %944 = vmatprep.subr.mxu0 0.0
  %945 = vmatpush1.xpose.msra.mxu0 0.0
  %946 = vmatprep.subr.mxu0 0.0
  %947 = vmatpush1.xpose.msra.mxu0 0.0
  %948 = vmatprep.subr.mxu0 0.0
  %949 = vmatpush1.xpose.msra.mxu0 0.0
  %950 = vmatprep.subr.mxu0 0.0
  %951 = vmatpush1.xpose.msra.mxu0 0.0
  %952 = vmatprep.subr.mxu0 0.0
  %953 = vmatpush1.xpose.msra.mxu0 0.0
  %954 = vmatprep.subr.mxu0 0.0
  %955 = vmatpush1.xpose.msra.mxu0 0.0
  %956 = vmatprep.subr.mxu0 0.0
  %957 = vmatpush1.xpose.msra.mxu0 0.0
  %958 = vmatprep.subr.mxu0 0.0
  %959 = vmatpush1.xpose.msra.mxu0 0.0
  %960 = vmatprep.subr.mxu0 0.0
  %961 = vmatpush1.xpose.msra.mxu0 0.0
  %962 = vmatprep.mubr.f32.mxu0 0.0
  %963 = vmatmul.mubr.f32.gmra.mrb[0].mxu0 %v886
  %v964 = vpop.f32.mrb[0].mxu0
  %v965 = vadd.f32 0.0, %v964
  %v966 = vpop.f32.mrb[0].mxu0
  %967 = vmatprep.mubr.f32.mxu0 0.0
  %968 = vmatmul.mubr.f32.gmra.mrb[0].mxu0 %v888
  %v969 = vpop.f32.mrb[0].mxu0
  %v970 = vadd.f32 0.0, %v969
  %v971 = vpop.f32.mrb[0].mxu0
  %972 = vmatprep.mubr.f32.mxu0 0.0
  %973 = vmatmul.mubr.f32.gmra.mrb[0].mxu0 %v890
  %v974 = vpop.f32.mrb[0].mxu0
  %v975 = vadd.f32 0.0, %v974
  %v976 = vpop.f32.mrb[0].mxu0
  %977 = vdwg.mxu0
  %v978 = vmul.f32 %v965, 0.35355338
  %v979 = vmul.f32 %v970, 0.35355338
  %v980 = vmul.f32 %v975, 0.35355338
  %v981 = vld [vmem:[%s1 + $0x78] sm:$0xff]
  %v982 = vld [vmem:[%s1 + $0x80] sm:$0xff]
  %v983 = vld [vmem:[%s1 + $0x88] sm:$0xf]
  %v984 = vadd.f32 %v978, %v981
  %v985 = vadd.f32 %v979, %v982
  %v986 = vadd.f32 %v980, %v983
  %vm987 = vcmask 162816
  %v988 = vsel %vm987, %v984, -inf
  %989 = vmax.xlane.f32.xlu0 %v988
  %v990 = vpop.xlane.xlu0 %989
  %v991 = vsel %vm987, %v985, -inf
  %992 = vmax.xlane.f32.xlu0 %v991
  %v993 = vpop.xlane.xlu0 %992
  %vm994 = vcmask 158720
  %v995 = vsel %vm994, %v986, -inf
  %996 = vmax.xlane.f32.xlu0 %v995
  %v997 = vpop.xlane.xlu0 %996
  %v998 = vsub.f32 %v984, %v990
  %v999 = vsub.f32 %v985, %v993
  %v1000 = vsub.f32 %v986, %v997
  %v1001 = vmul.f32 %v998, 1.442695
  %v1002 = vpow.pop %v1001
  %v1003 = vmul.f32 %v999, 1.442695
  %v1004 = vpow.pop %v1003
  %v1005 = vmul.f32 %v1000, 1.442695
  %v1006 = vpow.pop %v1005
  %v1007 = vsel %vm987, %v1002, 0.0
  %1008 = vadd.xlane.f32.xlu0 %v1007
  %v1009 = vpop.xlane.xlu0 %1008
  %v1010 = vsel %vm987, %v1004, 0.0
  %1011 = vadd.xlane.f32.xlu0 %v1010
  %v1012 = vpop.xlane.xlu0 %1011
  %v1013 = vsel %vm994, %v1006, 0.0
  %1014 = vadd.xlane.f32.xlu0 %v1013
  %v1015 = vpop.xlane.xlu0 %1014
  %v1016 = vrcp.pop %v1009
  %v1017 = vrcp.pop %v1012
  %v1018 = vrcp.pop %v1015
  %v1019 = vmul.f32 %v1002, %v1016
  %v1020 = vmul.f32 %v1004, %v1017
  %v1021 = vmul.f32 %v1006, %v1018
  %1022 = vrot.lane.b32.xlu0 %v864, 112
  %v1023 = vpop.permute.xlu0 %1022
  %1024 = vrot.lane.b32.xlu0 %v869, 112
  %v1025 = vpop.permute.xlu0 %1024
  %1026 = vrot.lane.b32.xlu0 %v874, 112
  %v1027 = vpop.permute.xlu0 %1026
  %v1031 = vsel %vm987, %v1019, 0
  %v1034 = vsel %vm987, %v1020, 0
  %v1037 = vsel %vm987, %v1021, 0
  %v1039 = vsel %vm29, %v1027, 0
  %1041 = vmatprep.subr.mxu0 0.0
  %1042 = vmatpush1.msra.mxu0 %v1023
  %1043 = vmatprep.subr.mxu0 0.0
  %1044 = vmatpush1.msra.mxu0 %v1025
  %1045 = vmatprep.subr.mxu0 0.0
  %1046 = vmatpush1.msra.mxu0 %v1039
  %1047 = vmatprep.subr.mxu0 0.0
  %1048 = vmatpush1.msra.mxu0 0.0
  %1049 = vmatprep.subr.mxu0 0.0
  %1050 = vmatpush1.msra.mxu0 0.0
  %1051 = vmatprep.subr.mxu0 0.0
  %1052 = vmatpush1.msra.mxu0 0.0
  %1053 = vmatprep.subr.mxu0 0.0
  %1054 = vmatpush1.msra.mxu0 0.0
  %1055 = vmatprep.subr.mxu0 0.0
  %1056 = vmatpush1.msra.mxu0 0.0
  %1057 = vmatprep.subr.mxu0 0.0
  %1058 = vmatpush1.msra.mxu0 0.0
  %1059 = vmatprep.subr.mxu0 0.0
  %1060 = vmatpush1.msra.mxu0 0.0
  %1061 = vmatprep.subr.mxu0 0.0
  %1062 = vmatpush1.msra.mxu0 0.0
  %1063 = vmatprep.subr.mxu0 0.0
  %1064 = vmatpush1.msra.mxu0 0.0
  %1065 = vmatprep.subr.mxu0 0.0
  %1066 = vmatpush1.msra.mxu0 0.0
  %1067 = vmatprep.subr.mxu0 0.0
  %1068 = vmatpush1.msra.mxu0 0.0
  %1069 = vmatprep.subr.mxu0 0.0
  %1070 = vmatpush1.msra.mxu0 0.0
  %1071 = vmatprep.subr.mxu0 0.0
  %1072 = vmatpush1.msra.mxu0 0.0
  %1073 = vmatprep.subr.mxu0 0.0
  %1074 = vmatpush1.msra.mxu0 0.0
  %1075 = vmatprep.subr.mxu0 0.0
  %1076 = vmatpush1.msra.mxu0 0.0
  %1077 = vmatprep.subr.mxu0 0.0
  %1078 = vmatpush1.msra.mxu0 0.0
  %1079 = vmatprep.subr.mxu0 0.0
  %1080 = vmatpush1.msra.mxu0 0.0
  %1081 = vmatprep.subr.mxu0 0.0
  %1082 = vmatpush1.msra.mxu0 0.0
  %1083 = vmatprep.subr.mxu0 0.0
  %1084 = vmatpush1.msra.mxu0 0.0
  %1085 = vmatprep.subr.mxu0 0.0
  %1086 = vmatpush1.msra.mxu0 0.0
  %1087 = vmatprep.subr.mxu0 0.0
  %1088 = vmatpush1.msra.mxu0 0.0
  %1089 = vmatprep.subr.mxu0 0.0
  %1090 = vmatpush1.msra.mxu0 0.0
  %1091 = vmatprep.subr.mxu0 0.0
  %1092 = vmatpush1.msra.mxu0 0.0
  %1093 = vmatprep.subr.mxu0 0.0
  %1094 = vmatpush1.msra.mxu0 0.0
  %1095 = vmatprep.subr.mxu0 0.0
  %1096 = vmatpush1.msra.mxu0 0.0
  %1097 = vmatprep.subr.mxu0 0.0
  %1098 = vmatpush1.msra.mxu0 0.0
  %1099 = vmatprep.subr.mxu0 0.0
  %1100 = vmatpush1.msra.mxu0 0.0
  %1101 = vmatprep.subr.mxu0 0.0
  %1102 = vmatpush1.msra.mxu0 0.0
  %1103 = vmatprep.subr.mxu0 0.0
  %1104 = vmatpush1.msra.mxu0 0.0
  %1105 = vmatprep.mubr.f32.mxu0 0.0
  %1106 = vmatmul.mubr.f32.gmra.mrb[0].mxu0 %v1031
  %v1107 = vpop.f32.mrb[0].mxu0
  %v1108 = vadd.f32 0.0, %v1107
  %v1109 = vpop.f32.mrb[0].mxu0
  %1110 = vmatprep.mubr.f32.mxu0 0.0
  %1111 = vmatmul.mubr.f32.gmra.mrb[0].mxu0 %v1034
  %v1112 = vpop.f32.mrb[0].mxu0
  %v1113 = vadd.f32 0.0, %v1112
  %v1114 = vpop.f32.mrb[0].mxu0
  %1115 = vmatprep.mubr.f32.mxu0 0.0
  %1116 = vmatmul.mubr.f32.gmra.mrb[0].mxu0 %v1037
  %v1117 = vpop.f32.mrb[0].mxu0
  %v1118 = vadd.f32 0.0, %v1117
  %v1119 = vpop.f32.mrb[0].mxu0
  %1120 = vdwg.mxu0
  %v1121 = vld [vmem:[%s0 + $0xb0] sm:$0xff]
  %v1123 = vsel %vm205, %v1108, 0
  %v1126 = vsel %vm205, %v1113, 0
  %v1129 = vsel %vm205, %v1118, 0
  %1131 = vmatprep.subr.mxu0 0.0
  %1132 = vmatpush1.msra.mxu0 %v1121
  %1133 = vmatprep.subr.mxu0 0.0
  %1134 = vmatpush1.msra.mxu0 0.0
  %1135 = vmatprep.subr.mxu0 0.0
  %1136 = vmatpush1.msra.mxu0 0.0
  %1137 = vmatprep.subr.mxu0 0.0
  %1138 = vmatpush1.msra.mxu0 0.0
  %1139 = vmatprep.subr.mxu0 0.0
  %1140 = vmatpush1.msra.mxu0 0.0
  %1141 = vmatprep.subr.mxu0 0.0
  %1142 = vmatpush1.msra.mxu0 0.0
  %1143 = vmatprep.subr.mxu0 0.0
  %1144 = vmatpush1.msra.mxu0 0.0
  %1145 = vmatprep.subr.mxu0 0.0
  %1146 = vmatpush1.msra.mxu0 0.0
  %1147 = vmatprep.subr.mxu0 0.0
  %1148 = vmatpush1.msra.mxu0 0.0
  %1149 = vmatprep.subr.mxu0 0.0
  %1150 = vmatpush1.msra.mxu0 0.0
  %1151 = vmatprep.subr.mxu0 0.0
  %1152 = vmatpush1.msra.mxu0 0.0
  %1153 = vmatprep.subr.mxu0 0.0
  %1154 = vmatpush1.msra.mxu0 0.0
  %1155 = vmatprep.subr.mxu0 0.0
  %1156 = vmatpush1.msra.mxu0 0.0
  %1157 = vmatprep.subr.mxu0 0.0
  %1158 = vmatpush1.msra.mxu0 0.0
  %1159 = vmatprep.subr.mxu0 0.0
  %1160 = vmatpush1.msra.mxu0 0.0
  %1161 = vmatprep.subr.mxu0 0.0
  %1162 = vmatpush1.msra.mxu0 0.0
  %1163 = vmatprep.subr.mxu0 0.0
  %1164 = vmatpush1.msra.mxu0 0.0
  %1165 = vmatprep.subr.mxu0 0.0
  %1166 = vmatpush1.msra.mxu0 0.0
  %1167 = vmatprep.subr.mxu0 0.0
  %1168 = vmatpush1.msra.mxu0 0.0
  %1169 = vmatprep.subr.mxu0 0.0
  %1170 = vmatpush1.msra.mxu0 0.0
  %1171 = vmatprep.subr.mxu0 0.0
  %1172 = vmatpush1.msra.mxu0 0.0
  %1173 = vmatprep.subr.mxu0 0.0
  %1174 = vmatpush1.msra.mxu0 0.0
  %1175 = vmatprep.subr.mxu0 0.0
  %1176 = vmatpush1.msra.mxu0 0.0
  %1177 = vmatprep.subr.mxu0 0.0
  %1178 = vmatpush1.msra.mxu0 0.0
  %1179 = vmatprep.subr.mxu0 0.0
  %1180 = vmatpush1.msra.mxu0 0.0
  %1181 = vmatprep.subr.mxu0 0.0
  %1182 = vmatpush1.msra.mxu0 0.0
  %1183 = vmatprep.subr.mxu0 0.0
  %1184 = vmatpush1.msra.mxu0 0.0
  %1185 = vmatprep.subr.mxu0 0.0
  %1186 = vmatpush1.msra.mxu0 0.0
  %1187 = vmatprep.subr.mxu0 0.0
  %1188 = vmatpush1.msra.mxu0 0.0
  %1189 = vmatprep.subr.mxu0 0.0
  %1190 = vmatpush1.msra.mxu0 0.0
  %1191 = vmatprep.subr.mxu0 0.0
  %1192 = vmatpush1.msra.mxu0 0.0
  %1193 = vmatprep.subr.mxu0 0.0
  %1194 = vmatpush1.msra.mxu0 0.0
  %1195 = vmatprep.mubr.f32.mxu0 0.0
  %1196 = vmatmul.mubr.f32.gmra.mrb[0].mxu0 %v1123
  %v1197 = vpop.f32.mrb[0].mxu0
  %v1198 = vadd.f32 %v776, %v1197
  %v1199 = vpop.f32.mrb[0].mxu0
  %1200 = vmatprep.mubr.f32.mxu0 0.0
  %1201 = vmatmul.mubr.f32.gmra.mrb[0].mxu0 %v1126
  %v1202 = vpop.f32.mrb[0].mxu0
  %v1203 = vadd.f32 %v777, %v1202
  %v1204 = vpop.f32.mrb[0].mxu0
  %1205 = vmatprep.mubr.f32.mxu0 0.0
  %1206 = vmatmul.mubr.f32.gmra.mrb[0].mxu0 %v1129
  %v1207 = vpop.f32.mrb[0].mxu0
  %v1208 = vadd.f32 %v778, %v1207
  %v1209 = vpop.f32.mrb[0].mxu0
  %1210 = vdwg.mxu0
  %v1211 = vsel %vm117, %v1198, 0.0
  %1212 = vadd.xlane.f32.xlu0 %v1211
  %v1213 = vpop.xlane.xlu0 %1212
  %v1214 = vsel %vm117, %v1203, 0.0
  %1215 = vadd.xlane.f32.xlu0 %v1214
  %v1216 = vpop.xlane.xlu0 %1215
  %vm1217 = vcmask 257024
  %v1218 = vsel %vm1217, %v1208, 0.0
  %1219 = vadd.xlane.f32.xlu0 %v1218
  %v1220 = vpop.xlane.xlu0 %1219
  %v1221 = vmul.f32 %v1213, %v495
  %v1222 = vmul.f32 %v1216, %v495
  %v1223 = vmul.f32 %v1220, %v495
  %v1224 = vsub.f32 %v1198, %v1221
  %v1225 = vsub.f32 %v1203, %v1222
  %v1226 = vsub.f32 %v1208, %v1223
  %v1227 = vmul.f32 %v1224, %v1224
  %v1228 = vmul.f32 %v1225, %v1225
  %v1229 = vmul.f32 %v1226, %v1226
  %v1230 = vsel %vm117, %v1227, 0.0
  %1231 = vadd.xlane.f32.xlu0 %v1230
  %v1232 = vpop.xlane.xlu0 %1231
  %v1233 = vsel %vm117, %v1228, 0.0
  %1234 = vadd.xlane.f32.xlu0 %v1233
  %v1235 = vpop.xlane.xlu0 %1234
  %v1236 = vsel %vm1217, %v1229, 0.0
  %1237 = vadd.xlane.f32.xlu0 %v1236
  %v1238 = vpop.xlane.xlu0 %1237
  %v1239 = vmul.f32 %v1232, %v495
  %v1240 = vmul.f32 %v1235, %v495
  %v1241 = vmul.f32 %v1238, %v495
  %v1242 = vadd.f32 %v1239, 1e-05
  %v1243 = vadd.f32 %v1240, 1e-05
  %v1244 = vadd.f32 %v1241, 1e-05
  %v1245 = vrsqrt.pop %v1242
  %v1246 = vrsqrt.pop %v1243
  %v1247 = vrsqrt.pop %v1244
  %v1248 = vmul.f32 %v1224, %v1245
  %v1249 = vmul.f32 %v1225, %v1246
  %v1250 = vmul.f32 %v1226, %v1247
  %v1251 = vld [vmem:[%s1 + $0xc8] sm:$0x1]
  %v1252 = vlaneseq
  %v1253 = vshrl.u32 %v1252, 7
  %v1254 = vsub.s32 0, %v1253
  %v1255 = vrot.slane %v1251, %v1254
  %v1256 = vmul.f32 %v1248, %v1255
  %v1257 = vmul.f32 %v1249, %v1255
  %v1258 = vmul.f32 %v1250, %v1255
  %v1259 = vld [vmem:[%s1 + $0xd0] sm:$0x1]
  %v1260 = vlaneseq
  %v1261 = vshrl.u32 %v1260, 7
  %v1262 = vsub.s32 0, %v1261
  %v1263 = vrot.slane %v1259, %v1262
  %v1264 = vadd.f32 %v1256, %v1263
  %v1265 = vadd.f32 %v1257, %v1263
  %v1266 = vadd.f32 %v1258, %v1263
  %v1267 = vld [vmem:[%s0 + $0xb8] sm:$0xff]
  %v1268 = vld [vmem:[%s0 + $0xc0] sm:$0xff]
  %v1269 = vld [vmem:[%s0 + $0xc8] sm:$0xff]
  %v1270 = vld [vmem:[%s0 + $0xd0] sm:$0xff]
  %v1271 = vld [vmem:[%s1 + $0x40] sm:$0x1]
  %v1272 = vlaneseq
  %v1273 = vshrl.u32 %v1272, 7
  %v1274 = vsub.s32 0, %v1273
  %v1275 = vrot.slane %v1271, %v1274
  %v1277 = vsel %vm117, %v1264, 0
  %v1280 = vsel %vm117, %v1265, 0
  %v1283 = vsel %vm117, %v1266, 0
  %1285 = vmatprep.subr.mxu0 0.0
  %1286 = vmatpush1.msra.mxu0 %v1267
  %1287 = vmatprep.subr.mxu0 0.0
  %1288 = vmatpush1.msra.mxu0 %v1268
  %1289 = vmatprep.subr.mxu0 0.0
  %1290 = vmatpush1.msra.mxu0 %v1269
  %1291 = vmatprep.subr.mxu0 0.0
  %1292 = vmatpush1.msra.mxu0 %v1270
  %1293 = vmatprep.subr.mxu0 0.0
  %1294 = vmatpush1.msra.mxu0 0.0
  %1295 = vmatprep.subr.mxu0 0.0
  %1296 = vmatpush1.msra.mxu0 0.0
  %1297 = vmatprep.subr.mxu0 0.0
  %1298 = vmatpush1.msra.mxu0 0.0
  %1299 = vmatprep.subr.mxu0 0.0
  %1300 = vmatpush1.msra.mxu0 0.0
  %1301 = vmatprep.subr.mxu0 0.0
  %1302 = vmatpush1.msra.mxu0 0.0
  %1303 = vmatprep.subr.mxu0 0.0
  %1304 = vmatpush1.msra.mxu0 0.0
  %1305 = vmatprep.subr.mxu0 0.0
  %1306 = vmatpush1.msra.mxu0 0.0
  %1307 = vmatprep.subr.mxu0 0.0
  %1308 = vmatpush1.msra.mxu0 0.0
  %1309 = vmatprep.subr.mxu0 0.0
  %1310 = vmatpush1.msra.mxu0 0.0
  %1311 = vmatprep.subr.mxu0 0.0
  %1312 = vmatpush1.msra.mxu0 0.0
  %1313 = vmatprep.subr.mxu0 0.0
  %1314 = vmatpush1.msra.mxu0 0.0
  %1315 = vmatprep.subr.mxu0 0.0
  %1316 = vmatpush1.msra.mxu0 0.0
  %1317 = vmatprep.subr.mxu0 0.0
  %1318 = vmatpush1.msra.mxu0 0.0
  %1319 = vmatprep.subr.mxu0 0.0
  %1320 = vmatpush1.msra.mxu0 0.0
  %1321 = vmatprep.subr.mxu0 0.0
  %1322 = vmatpush1.msra.mxu0 0.0
  %1323 = vmatprep.subr.mxu0 0.0
  %1324 = vmatpush1.msra.mxu0 0.0
  %1325 = vmatprep.subr.mxu0 0.0
  %1326 = vmatpush1.msra.mxu0 0.0
  %1327 = vmatprep.subr.mxu0 0.0
  %1328 = vmatpush1.msra.mxu0 0.0
  %1329 = vmatprep.subr.mxu0 0.0
  %1330 = vmatpush1.msra.mxu0 0.0
  %1331 = vmatprep.subr.mxu0 0.0
  %1332 = vmatpush1.msra.mxu0 0.0
  %1333 = vmatprep.subr.mxu0 0.0
  %1334 = vmatpush1.msra.mxu0 0.0
  %1335 = vmatprep.subr.mxu0 0.0
  %1336 = vmatpush1.msra.mxu0 0.0
  %1337 = vmatprep.subr.mxu0 0.0
  %1338 = vmatpush1.msra.mxu0 0.0
  %1339 = vmatprep.subr.mxu0 0.0
  %1340 = vmatpush1.msra.mxu0 0.0
  %1341 = vmatprep.subr.mxu0 0.0
  %1342 = vmatpush1.msra.mxu0 0.0
  %1343 = vmatprep.subr.mxu0 0.0
  %1344 = vmatpush1.msra.mxu0 0.0
  %1345 = vmatprep.subr.mxu0 0.0
  %1346 = vmatpush1.msra.mxu0 0.0
  %1347 = vmatprep.subr.mxu0 0.0
  %1348 = vmatpush1.msra.mxu0 0.0
  %1349 = vmatprep.mubr.f32.mxu0 0.0
  %1350 = vmatmul.mubr.f32.gmra.mrb[0].mxu0 %v1277
  %v1351 = vpop.f32.mrb[0].mxu0
  %v1352 = vadd.f32 %v1275, %v1351
  %v1353 = vpop.f32.mrb[0].mxu0
  %1354 = vmatprep.mubr.f32.mxu0 0.0
  %1355 = vmatmul.mubr.f32.gmra.mrb[0].mxu0 %v1280
  %v1356 = vpop.f32.mrb[0].mxu0
  %v1357 = vadd.f32 %v1275, %v1356
  %v1358 = vpop.f32.mrb[0].mxu0
  %1359 = vmatprep.mubr.f32.mxu0 0.0
  %1360 = vmatmul.mubr.f32.gmra.mrb[0].mxu0 %v1283
  %v1361 = vpop.f32.mrb[0].mxu0
  %v1362 = vadd.f32 %v1275, %v1361
  %v1363 = vpop.f32.mrb[0].mxu0
  %1364 = vdwg.mxu0
  %v1365 = vld [vmem:[%s0 + $0xd8] sm:$0xff]
  %v1366 = vld [vmem:[%s0 + $0xe0] sm:$0xff]
  %v1367 = vld [vmem:[%s0 + $0xe8] sm:$0xff]
  %v1368 = vld [vmem:[%s0 + $0xf0] sm:$0xff]
  %v1369 = vld [vmem:[%s1 + $0x48] sm:$0x1]
  %v1370 = vlaneseq
  %v1371 = vshrl.u32 %v1370, 7
  %v1372 = vsub.s32 0, %v1371
  %v1373 = vrot.slane %v1369, %v1372
  %v1375 = vsel %vm117, %v745, 0
  %v1378 = vsel %vm117, %v746, 0
  %1380 = vmatprep.subr.mxu0 0.0
  %1381 = vmatpush1.msra.mxu0 %v1365
  %1382 = vmatprep.subr.mxu0 0.0
  %1383 = vmatpush1.msra.mxu0 %v1366
  %1384 = vmatprep.subr.mxu0 0.0
  %1385 = vmatpush1.msra.mxu0 %v1367
  %1386 = vmatprep.subr.mxu0 0.0
  %1387 = vmatpush1.msra.mxu0 %v1368
  %1388 = vmatprep.subr.mxu0 0.0
  %1389 = vmatpush1.msra.mxu0 0.0
  %1390 = vmatprep.subr.mxu0 0.0
  %1391 = vmatpush1.msra.mxu0 0.0
  %1392 = vmatprep.subr.mxu0 0.0
  %1393 = vmatpush1.msra.mxu0 0.0
  %1394 = vmatprep.subr.mxu0 0.0
  %1395 = vmatpush1.msra.mxu0 0.0
  %1396 = vmatprep.subr.mxu0 0.0
  %1397 = vmatpush1.msra.mxu0 0.0
  %1398 = vmatprep.subr.mxu0 0.0
  %1399 = vmatpush1.msra.mxu0 0.0
  %1400 = vmatprep.subr.mxu0 0.0
  %1401 = vmatpush1.msra.mxu0 0.0
  %1402 = vmatprep.subr.mxu0 0.0
  %1403 = vmatpush1.msra.mxu0 0.0
  %1404 = vmatprep.subr.mxu0 0.0
  %1405 = vmatpush1.msra.mxu0 0.0
  %1406 = vmatprep.subr.mxu0 0.0
  %1407 = vmatpush1.msra.mxu0 0.0
  %1408 = vmatprep.subr.mxu0 0.0
  %1409 = vmatpush1.msra.mxu0 0.0
  %1410 = vmatprep.subr.mxu0 0.0
  %1411 = vmatpush1.msra.mxu0 0.0
  %1412 = vmatprep.subr.mxu0 0.0
  %1413 = vmatpush1.msra.mxu0 0.0
  %1414 = vmatprep.subr.mxu0 0.0
  %1415 = vmatpush1.msra.mxu0 0.0
  %1416 = vmatprep.subr.mxu0 0.0
  %1417 = vmatpush1.msra.mxu0 0.0
  %1418 = vmatprep.subr.mxu0 0.0
  %1419 = vmatpush1.msra.mxu0 0.0
  %1420 = vmatprep.subr.mxu0 0.0
  %1421 = vmatpush1.msra.mxu0 0.0
  %1422 = vmatprep.subr.mxu0 0.0
  %1423 = vmatpush1.msra.mxu0 0.0
  %1424 = vmatprep.subr.mxu0 0.0
  %1425 = vmatpush1.msra.mxu0 0.0
  %1426 = vmatprep.subr.mxu0 0.0
  %1427 = vmatpush1.msra.mxu0 0.0
  %1428 = vmatprep.subr.mxu0 0.0
  %1429 = vmatpush1.msra.mxu0 0.0
  %1430 = vmatprep.subr.mxu0 0.0
  %1431 = vmatpush1.msra.mxu0 0.0
  %1432 = vmatprep.subr.mxu0 0.0
  %1433 = vmatpush1.msra.mxu0 0.0
  %1434 = vmatprep.subr.mxu0 0.0
  %1435 = vmatpush1.msra.mxu0 0.0
  %1436 = vmatprep.subr.mxu0 0.0
  %1437 = vmatpush1.msra.mxu0 0.0
  %1438 = vmatprep.subr.mxu0 0.0
  %1439 = vmatpush1.msra.mxu0 0.0
  %1440 = vmatprep.subr.mxu0 0.0
  %1441 = vmatpush1.msra.mxu0 0.0
  %1442 = vmatprep.subr.mxu0 0.0
  %1443 = vmatpush1.msra.mxu0 0.0
  %1444 = vmatprep.mubr.f32.mxu0 0.0
  %1445 = vmatmul.mubr.f32.gmra.mrb[0].mxu0 %v1375
  %v1446 = vpop.f32.mrb[0].mxu0
  %v1447 = vadd.f32 %v1373, %v1446
  %v1448 = vpop.f32.mrb[0].mxu0
  %1449 = vmatprep.mubr.f32.mxu0 0.0
  %1450 = vmatmul.mubr.f32.gmra.mrb[0].mxu0 %v1378
  %v1451 = vpop.f32.mrb[0].mxu0
  %v1452 = vadd.f32 %v1373, %v1451
  %v1453 = vpop.f32.mrb[0].mxu0
  %1454 = vdwg.mxu0
  %v1456 = vsel %vm205, %v1352, 0
  %v1459 = vsel %vm205, %v1357, 0
  %v1462 = vsel %vm205, %v1362, 0
  %v1465 = vsel %vm205, %v1447, 0
  %v1468 = vsel %vm205, %v1452, 0
  %1470 = vmatprep.subr.mxu0 0.0
  %1471 = vmatpush1.xpose.msra.mxu0 %v1465
  %1472 = vmatprep.subr.mxu0 0.0
  %1473 = vmatpush1.xpose.msra.mxu0 %v1468
  %1474 = vmatprep.subr.mxu0 0.0
  %1475 = vmatpush1.xpose.msra.mxu0 0.0
  %1476 = vmatprep.subr.mxu0 0.0
  %1477 = vmatpush1.xpose.msra.mxu0 0.0
  %1478 = vmatprep.subr.mxu0 0.0
  %1479 = vmatpush1.xpose.msra.mxu0 0.0
  %1480 = vmatprep.subr.mxu0 0.0
  %1481 = vmatpush1.xpose.msra.mxu0 0.0
  %1482 = vmatprep.subr.mxu0 0.0
  %1483 = vmatpush1.xpose.msra.mxu0 0.0
  %1484 = vmatprep.subr.mxu0 0.0
  %1485 = vmatpush1.xpose.msra.mxu0 0.0
  %1486 = vmatprep.subr.mxu0 0.0
  %1487 = vmatpush1.xpose.msra.mxu0 0.0
  %1488 = vmatprep.subr.mxu0 0.0
  %1489 = vmatpush1.xpose.msra.mxu0 0.0
  %1490 = vmatprep.subr.mxu0 0.0
  %1491 = vmatpush1.xpose.msra.mxu0 0.0
  %1492 = vmatprep.subr.mxu0 0.0
  %1493 = vmatpush1.xpose.msra.mxu0 0.0
  %1494 = vmatprep.subr.mxu0 0.0
  %1495 = vmatpush1.xpose.msra.mxu0 0.0
  %1496 = vmatprep.subr.mxu0 0.0
  %1497 = vmatpush1.xpose.msra.mxu0 0.0
  %1498 = vmatprep.subr.mxu0 0.0
  %1499 = vmatpush1.xpose.msra.mxu0 0.0
  %1500 = vmatprep.subr.mxu0 0.0
  %1501 = vmatpush1.xpose.msra.mxu0 0.0
  %1502 = vmatprep.subr.mxu0 0.0
  %1503 = vmatpush1.xpose.msra.mxu0 0.0
  %1504 = vmatprep.subr.mxu0 0.0
  %1505 = vmatpush1.xpose.msra.mxu0 0.0
  %1506 = vmatprep.subr.mxu0 0.0
  %1507 = vmatpush1.xpose.msra.mxu0 0.0
  %1508 = vmatprep.subr.mxu0 0.0
  %1509 = vmatpush1.xpose.msra.mxu0 0.0
  %1510 = vmatprep.subr.mxu0 0.0
  %1511 = vmatpush1.xpose.msra.mxu0 0.0
  %1512 = vmatprep.subr.mxu0 0.0
  %1513 = vmatpush1.xpose.msra.mxu0 0.0
  %1514 = vmatprep.subr.mxu0 0.0
  %1515 = vmatpush1.xpose.msra.mxu0 0.0
  %1516 = vmatprep.subr.mxu0 0.0
  %1517 = vmatpush1.xpose.msra.mxu0 0.0
  %1518 = vmatprep.subr.mxu0 0.0
  %1519 = vmatpush1.xpose.msra.mxu0 0.0
  %1520 = vmatprep.subr.mxu0 0.0
  %1521 = vmatpush1.xpose.msra.mxu0 0.0
  %1522 = vmatprep.subr.mxu0 0.0
  %1523 = vmatpush1.xpose.msra.mxu0 0.0
  %1524 = vmatprep.subr.mxu0 0.0
  %1525 = vmatpush1.xpose.msra.mxu0 0.0
  %1526 = vmatprep.subr.mxu0 0.0
  %1527 = vmatpush1.xpose.msra.mxu0 0.0
  %1528 = vmatprep.subr.mxu0 0.0
  %1529 = vmatpush1.xpose.msra.mxu0 0.0
  %1530 = vmatprep.subr.mxu0 0.0
  %1531 = vmatpush1.xpose.msra.mxu0 0.0
  %1532 = vmatprep.subr.mxu0 0.0
  %1533 = vmatpush1.xpose.msra.mxu0 0.0
  %1534 = vmatprep.mubr.f32.mxu0 0.0
  %1535 = vmatmul.mubr.f32.gmra.mrb[0].mxu0 %v1456
  %v1536 = vpop.f32.mrb[0].mxu0
  %v1537 = vadd.f32 0.0, %v1536
  %v1538 = vpop.f32.mrb[0].mxu0
  %1539 = vmatprep.mubr.f32.mxu0 0.0
  %1540 = vmatmul.mubr.f32.gmra.mrb[0].mxu0 %v1459
  %v1541 = vpop.f32.mrb[0].mxu0
  %v1542 = vadd.f32 0.0, %v1541
  %v1543 = vpop.f32.mrb[0].mxu0
  %1544 = vmatprep.mubr.f32.mxu0 0.0
  %1545 = vmatmul.mubr.f32.gmra.mrb[0].mxu0 %v1462
  %v1546 = vpop.f32.mrb[0].mxu0
  %v1547 = vadd.f32 0.0, %v1546
  %v1548 = vpop.f32.mrb[0].mxu0
  %1549 = vdwg.mxu0
  %v1550 = vmul.f32 %v1537, 0.35355338
  %v1551 = vmul.f32 %v1542, 0.35355338
  %v1552 = vmul.f32 %v1547, 0.35355338
  %v1553 = vld [vmem:[%s1 + $0x90] sm:$0xff]
  %v1554 = vld [vmem:[%s1 + $0x98] sm:$0xff]
  %v1555 = vld [vmem:[%s1 + $0xa0] sm:$0xf]
  %v1556 = vadd.f32 %v1550, %v1553
  %v1557 = vadd.f32 %v1551, %v1554
  %v1558 = vadd.f32 %v1552, %v1555
  %v1559 = vsel %vm295, %v1556, -inf
  %1560 = vmax.xlane.f32.xlu0 %v1559
  %v1561 = vpop.xlane.xlu0 %1560
  %v1562 = vsel %vm295, %v1557, -inf
  %1563 = vmax.xlane.f32.xlu0 %v1562
  %v1564 = vpop.xlane.xlu0 %1563
  %vm1565 = vcmask 125952
  %v1566 = vsel %vm1565, %v1558, -inf
  %1567 = vmax.xlane.f32.xlu0 %v1566
  %v1568 = vpop.xlane.xlu0 %1567
  %v1569 = vsub.f32 %v1556, %v1561
  %v1570 = vsub.f32 %v1557, %v1564
  %v1571 = vsub.f32 %v1558, %v1568
  %v1572 = vmul.f32 %v1569, 1.442695
  %v1573 = vpow.pop %v1572
  %v1574 = vmul.f32 %v1570, 1.442695
  %v1575 = vpow.pop %v1574
  %v1576 = vmul.f32 %v1571, 1.442695
  %v1577 = vpow.pop %v1576
  %v1578 = vsel %vm295, %v1573, 0.0
  %1579 = vadd.xlane.f32.xlu0 %v1578
  %v1580 = vpop.xlane.xlu0 %1579
  %v1581 = vsel %vm295, %v1575, 0.0
  %1582 = vadd.xlane.f32.xlu0 %v1581
  %v1583 = vpop.xlane.xlu0 %1582
  %v1584 = vsel %vm1565, %v1577, 0.0
  %1585 = vadd.xlane.f32.xlu0 %v1584
  %v1586 = vpop.xlane.xlu0 %1585
  %v1587 = vrcp.pop %v1580
  %v1588 = vrcp.pop %v1583
  %v1589 = vrcp.pop %v1586
  %v1590 = vmul.f32 %v1573, %v1587
  %v1591 = vmul.f32 %v1575, %v1588
  %v1592 = vmul.f32 %v1577, %v1589
  %1593 = vrot.lane.b32.xlu0 %v1447, 120
  %v1594 = vpop.permute.xlu0 %1593
  %1595 = vrot.lane.b32.xlu0 %v1452, 120
  %v1596 = vpop.permute.xlu0 %1595
  %v1600 = vsel %vm295, %v1590, 0
  %v1603 = vsel %vm295, %v1591, 0
  %v1606 = vsel %vm295, %v1592, 0
  %1608 = vmatprep.subr.mxu0 0.0
  %1609 = vmatpush1.msra.mxu0 %v1594
  %1610 = vmatprep.subr.mxu0 0.0
  %1611 = vmatpush1.msra.mxu0 %v1596
  %1612 = vmatprep.subr.mxu0 0.0
  %1613 = vmatpush1.msra.mxu0 0.0
  %1614 = vmatprep.subr.mxu0 0.0
  %1615 = vmatpush1.msra.mxu0 0.0
  %1616 = vmatprep.subr.mxu0 0.0
  %1617 = vmatpush1.msra.mxu0 0.0
  %1618 = vmatprep.subr.mxu0 0.0
  %1619 = vmatpush1.msra.mxu0 0.0
  %1620 = vmatprep.subr.mxu0 0.0
  %1621 = vmatpush1.msra.mxu0 0.0
  %1622 = vmatprep.subr.mxu0 0.0
  %1623 = vmatpush1.msra.mxu0 0.0
  %1624 = vmatprep.subr.mxu0 0.0
  %1625 = vmatpush1.msra.mxu0 0.0
  %1626 = vmatprep.subr.mxu0 0.0
  %1627 = vmatpush1.msra.mxu0 0.0
  %1628 = vmatprep.subr.mxu0 0.0
  %1629 = vmatpush1.msra.mxu0 0.0
  %1630 = vmatprep.subr.mxu0 0.0
  %1631 = vmatpush1.msra.mxu0 0.0
  %1632 = vmatprep.subr.mxu0 0.0
  %1633 = vmatpush1.msra.mxu0 0.0
  %1634 = vmatprep.subr.mxu0 0.0
  %1635 = vmatpush1.msra.mxu0 0.0
  %1636 = vmatprep.subr.mxu0 0.0
  %1637 = vmatpush1.msra.mxu0 0.0
  %1638 = vmatprep.subr.mxu0 0.0
  %1639 = vmatpush1.msra.mxu0 0.0
  %1640 = vmatprep.subr.mxu0 0.0
  %1641 = vmatpush1.msra.mxu0 0.0
  %1642 = vmatprep.subr.mxu0 0.0
  %1643 = vmatpush1.msra.mxu0 0.0
  %1644 = vmatprep.subr.mxu0 0.0
  %1645 = vmatpush1.msra.mxu0 0.0
  %1646 = vmatprep.subr.mxu0 0.0
  %1647 = vmatpush1.msra.mxu0 0.0
  %1648 = vmatprep.subr.mxu0 0.0
  %1649 = vmatpush1.msra.mxu0 0.0
  %1650 = vmatprep.subr.mxu0 0.0
  %1651 = vmatpush1.msra.mxu0 0.0
  %1652 = vmatprep.subr.mxu0 0.0
  %1653 = vmatpush1.msra.mxu0 0.0
  %1654 = vmatprep.subr.mxu0 0.0
  %1655 = vmatpush1.msra.mxu0 0.0
  %1656 = vmatprep.subr.mxu0 0.0
  %1657 = vmatpush1.msra.mxu0 0.0
  %1658 = vmatprep.subr.mxu0 0.0
  %1659 = vmatpush1.msra.mxu0 0.0
  %1660 = vmatprep.subr.mxu0 0.0
  %1661 = vmatpush1.msra.mxu0 0.0
  %1662 = vmatprep.subr.mxu0 0.0
  %1663 = vmatpush1.msra.mxu0 0.0
  %1664 = vmatprep.subr.mxu0 0.0
  %1665 = vmatpush1.msra.mxu0 0.0
  %1666 = vmatprep.subr.mxu0 0.0
  %1667 = vmatpush1.msra.mxu0 0.0
  %1668 = vmatprep.subr.mxu0 0.0
  %1669 = vmatpush1.msra.mxu0 0.0
  %1670 = vmatprep.subr.mxu0 0.0
  %1671 = vmatpush1.msra.mxu0 0.0
  %1672 = vmatprep.mubr.f32.mxu0 0.0
  %1673 = vmatmul.mubr.f32.gmra.mrb[0].mxu0 %v1600
  %v1674 = vpop.f32.mrb[0].mxu0
  %v1675 = vadd.f32 0.0, %v1674
  %v1676 = vpop.f32.mrb[0].mxu0
  %1677 = vmatprep.mubr.f32.mxu0 0.0
  %1678 = vmatmul.mubr.f32.gmra.mrb[0].mxu0 %v1603
  %v1679 = vpop.f32.mrb[0].mxu0
  %v1680 = vadd.f32 0.0, %v1679
  %v1681 = vpop.f32.mrb[0].mxu0
  %1682 = vmatprep.mubr.f32.mxu0 0.0
  %1683 = vmatmul.mubr.f32.gmra.mrb[0].mxu0 %v1606
  %v1684 = vpop.f32.mrb[0].mxu0
  %v1685 = vadd.f32 0.0, %v1684
  %v1686 = vpop.f32.mrb[0].mxu0
  %1687 = vdwg.mxu0
  %v1688 = vld [vmem:[%s0 + $0xf8] sm:$0xff]
  %v1690 = vsel %vm205, %v1675, 0
  %v1693 = vsel %vm205, %v1680, 0
  %v1696 = vsel %vm205, %v1685, 0
  %1698 = vmatprep.subr.mxu0 0.0
  %1699 = vmatpush1.msra.mxu0 %v1688
  %1700 = vmatprep.subr.mxu0 0.0
  %1701 = vmatpush1.msra.mxu0 0.0
  %1702 = vmatprep.subr.mxu0 0.0
  %1703 = vmatpush1.msra.mxu0 0.0
  %1704 = vmatprep.subr.mxu0 0.0
  %1705 = vmatpush1.msra.mxu0 0.0
  %1706 = vmatprep.subr.mxu0 0.0
  %1707 = vmatpush1.msra.mxu0 0.0
  %1708 = vmatprep.subr.mxu0 0.0
  %1709 = vmatpush1.msra.mxu0 0.0
  %1710 = vmatprep.subr.mxu0 0.0
  %1711 = vmatpush1.msra.mxu0 0.0
  %1712 = vmatprep.subr.mxu0 0.0
  %1713 = vmatpush1.msra.mxu0 0.0
  %1714 = vmatprep.subr.mxu0 0.0
  %1715 = vmatpush1.msra.mxu0 0.0
  %1716 = vmatprep.subr.mxu0 0.0
  %1717 = vmatpush1.msra.mxu0 0.0
  %1718 = vmatprep.subr.mxu0 0.0
  %1719 = vmatpush1.msra.mxu0 0.0
  %1720 = vmatprep.subr.mxu0 0.0
  %1721 = vmatpush1.msra.mxu0 0.0
  %1722 = vmatprep.subr.mxu0 0.0
  %1723 = vmatpush1.msra.mxu0 0.0
  %1724 = vmatprep.subr.mxu0 0.0
  %1725 = vmatpush1.msra.mxu0 0.0
  %1726 = vmatprep.subr.mxu0 0.0
  %1727 = vmatpush1.msra.mxu0 0.0
  %1728 = vmatprep.subr.mxu0 0.0
  %1729 = vmatpush1.msra.mxu0 0.0
  %1730 = vmatprep.subr.mxu0 0.0
  %1731 = vmatpush1.msra.mxu0 0.0
  %1732 = vmatprep.subr.mxu0 0.0
  %1733 = vmatpush1.msra.mxu0 0.0
  %1734 = vmatprep.subr.mxu0 0.0
  %1735 = vmatpush1.msra.mxu0 0.0
  %1736 = vmatprep.subr.mxu0 0.0
  %1737 = vmatpush1.msra.mxu0 0.0
  %1738 = vmatprep.subr.mxu0 0.0
  %1739 = vmatpush1.msra.mxu0 0.0
  %1740 = vmatprep.subr.mxu0 0.0
  %1741 = vmatpush1.msra.mxu0 0.0
  %1742 = vmatprep.subr.mxu0 0.0
  %1743 = vmatpush1.msra.mxu0 0.0
  %1744 = vmatprep.subr.mxu0 0.0
  %1745 = vmatpush1.msra.mxu0 0.0
  %1746 = vmatprep.subr.mxu0 0.0
  %1747 = vmatpush1.msra.mxu0 0.0
  %1748 = vmatprep.subr.mxu0 0.0
  %1749 = vmatpush1.msra.mxu0 0.0
  %1750 = vmatprep.subr.mxu0 0.0
  %1751 = vmatpush1.msra.mxu0 0.0
  %1752 = vmatprep.subr.mxu0 0.0
  %1753 = vmatpush1.msra.mxu0 0.0
  %1754 = vmatprep.subr.mxu0 0.0
  %1755 = vmatpush1.msra.mxu0 0.0
  %1756 = vmatprep.subr.mxu0 0.0
  %1757 = vmatpush1.msra.mxu0 0.0
  %1758 = vmatprep.subr.mxu0 0.0
  %1759 = vmatpush1.msra.mxu0 0.0
  %1760 = vmatprep.subr.mxu0 0.0
  %1761 = vmatpush1.msra.mxu0 0.0
  %1762 = vmatprep.mubr.f32.mxu0 0.0
  %1763 = vmatmul.mubr.f32.gmra.mrb[0].mxu0 %v1690
  %v1764 = vpop.f32.mrb[0].mxu0
  %v1765 = vadd.f32 %v1264, %v1764
  %v1766 = vpop.f32.mrb[0].mxu0
  %1767 = vmatprep.mubr.f32.mxu0 0.0
  %1768 = vmatmul.mubr.f32.gmra.mrb[0].mxu0 %v1693
  %v1769 = vpop.f32.mrb[0].mxu0
  %v1770 = vadd.f32 %v1265, %v1769
  %v1771 = vpop.f32.mrb[0].mxu0
  %1772 = vmatprep.mubr.f32.mxu0 0.0
  %1773 = vmatmul.mubr.f32.gmra.mrb[0].mxu0 %v1696
  %v1774 = vpop.f32.mrb[0].mxu0
  %v1775 = vadd.f32 %v1266, %v1774
  %v1776 = vpop.f32.mrb[0].mxu0
  %1777 = vdwg.mxu0
  %v1778 = vsel %vm117, %v1765, 0.0
  %1779 = vadd.xlane.f32.xlu0 %v1778
  %v1780 = vpop.xlane.xlu0 %1779
  %v1781 = vsel %vm117, %v1770, 0.0
  %1782 = vadd.xlane.f32.xlu0 %v1781
  %v1783 = vpop.xlane.xlu0 %1782
  %v1784 = vsel %vm1217, %v1775, 0.0
  %1785 = vadd.xlane.f32.xlu0 %v1784
  %v1786 = vpop.xlane.xlu0 %1785
  %v1787 = vmul.f32 %v1780, %v495
  %v1788 = vmul.f32 %v1783, %v495
  %v1789 = vmul.f32 %v1786, %v495
  %v1790 = vsub.f32 %v1765, %v1787
  %v1791 = vsub.f32 %v1770, %v1788
  %v1792 = vsub.f32 %v1775, %v1789
  %v1793 = vmul.f32 %v1790, %v1790
  %v1794 = vmul.f32 %v1791, %v1791
  %v1795 = vmul.f32 %v1792, %v1792
  %v1796 = vsel %vm117, %v1793, 0.0
  %1797 = vadd.xlane.f32.xlu0 %v1796
  %v1798 = vpop.xlane.xlu0 %1797
  %v1799 = vsel %vm117, %v1794, 0.0
  %1800 = vadd.xlane.f32.xlu0 %v1799
  %v1801 = vpop.xlane.xlu0 %1800
  %v1802 = vsel %vm1217, %v1795, 0.0
  %1803 = vadd.xlane.f32.xlu0 %v1802
  %v1804 = vpop.xlane.xlu0 %1803
  %v1805 = vmul.f32 %v1798, %v495
  %v1806 = vmul.f32 %v1801, %v495
  %v1807 = vmul.f32 %v1804, %v495
  %v1808 = vadd.f32 %v1805, 1e-05
  %v1809 = vadd.f32 %v1806, 1e-05
  %v1810 = vadd.f32 %v1807, 1e-05
  %v1811 = vrsqrt.pop %v1808
  %v1812 = vrsqrt.pop %v1809
  %v1813 = vrsqrt.pop %v1810
  %v1814 = vmul.f32 %v1790, %v1811
  %v1815 = vmul.f32 %v1791, %v1812
  %v1816 = vmul.f32 %v1792, %v1813
  %v1817 = vld [vmem:[%s1 + $0xd8] sm:$0x1]
  %v1818 = vlaneseq
  %v1819 = vshrl.u32 %v1818, 7
  %v1820 = vsub.s32 0, %v1819
  %v1821 = vrot.slane %v1817, %v1820
  %v1822 = vmul.f32 %v1814, %v1821
  %v1823 = vmul.f32 %v1815, %v1821
  %v1824 = vmul.f32 %v1816, %v1821
  %v1825 = vld [vmem:[%s1 + $0xe0] sm:$0x1]
  %v1826 = vlaneseq
  %v1827 = vshrl.u32 %v1826, 7
  %v1828 = vsub.s32 0, %v1827
  %v1829 = vrot.slane %v1825, %v1828
  %v1830 = vadd.f32 %v1822, %v1829
  %v1831 = vadd.f32 %v1823, %v1829
  %v1832 = vadd.f32 %v1824, %v1829
  %v1833 = vld [vmem:[%s0 + $0x100] sm:$0xff]
  %v1834 = vld [vmem:[%s0 + $0x108] sm:$0xff]
  %v1835 = vld [vmem:[%s0 + $0x110] sm:$0xff]
  %v1836 = vld [vmem:[%s0 + $0x118] sm:$0xff]
  %v1838 = vsel %vm117, %v1830, 0
  %v1841 = vsel %vm117, %v1831, 0
  %v1844 = vsel %vm117, %v1832, 0
  %1846 = vmatprep.subr.mxu0 0.0
  %1847 = vmatpush1.msra.mxu0 %v1833
  %1848 = vmatprep.subr.mxu0 0.0
  %1849 = vmatpush1.msra.mxu0 %v1834
  %1850 = vmatprep.subr.mxu0 0.0
  %1851 = vmatpush1.msra.mxu0 %v1835
  %1852 = vmatprep.subr.mxu0 0.0
  %1853 = vmatpush1.msra.mxu0 %v1836
  %1854 = vmatprep.subr.mxu0 0.0
  %1855 = vmatpush1.msra.mxu0 0.0
  %1856 = vmatprep.subr.mxu0 0.0
  %1857 = vmatpush1.msra.mxu0 0.0
  %1858 = vmatprep.subr.mxu0 0.0
  %1859 = vmatpush1.msra.mxu0 0.0
  %1860 = vmatprep.subr.mxu0 0.0
  %1861 = vmatpush1.msra.mxu0 0.0
  %1862 = vmatprep.subr.mxu0 0.0
  %1863 = vmatpush1.msra.mxu0 0.0
  %1864 = vmatprep.subr.mxu0 0.0
  %1865 = vmatpush1.msra.mxu0 0.0
  %1866 = vmatprep.subr.mxu0 0.0
  %1867 = vmatpush1.msra.mxu0 0.0
  %1868 = vmatprep.subr.mxu0 0.0
  %1869 = vmatpush1.msra.mxu0 0.0
  %1870 = vmatprep.subr.mxu0 0.0
  %1871 = vmatpush1.msra.mxu0 0.0
  %1872 = vmatprep.subr.mxu0 0.0
  %1873 = vmatpush1.msra.mxu0 0.0
  %1874 = vmatprep.subr.mxu0 0.0
  %1875 = vmatpush1.msra.mxu0 0.0
  %1876 = vmatprep.subr.mxu0 0.0
  %1877 = vmatpush1.msra.mxu0 0.0
  %1878 = vmatprep.subr.mxu0 0.0
  %1879 = vmatpush1.msra.mxu0 0.0
  %1880 = vmatprep.subr.mxu0 0.0
  %1881 = vmatpush1.msra.mxu0 0.0
  %1882 = vmatprep.subr.mxu0 0.0
  %1883 = vmatpush1.msra.mxu0 0.0
  %1884 = vmatprep.subr.mxu0 0.0
  %1885 = vmatpush1.msra.mxu0 0.0
  %1886 = vmatprep.subr.mxu0 0.0
  %1887 = vmatpush1.msra.mxu0 0.0
  %1888 = vmatprep.subr.mxu0 0.0
  %1889 = vmatpush1.msra.mxu0 0.0
  %1890 = vmatprep.subr.mxu0 0.0
  %1891 = vmatpush1.msra.mxu0 0.0
  %1892 = vmatprep.subr.mxu0 0.0
  %1893 = vmatpush1.msra.mxu0 0.0
  %1894 = vmatprep.subr.mxu0 0.0
  %1895 = vmatpush1.msra.mxu0 0.0
  %1896 = vmatprep.subr.mxu0 0.0
  %1897 = vmatpush1.msra.mxu0 0.0
  %1898 = vmatprep.subr.mxu0 0.0
  %1899 = vmatpush1.msra.mxu0 0.0
  %1900 = vmatprep.subr.mxu0 0.0
  %1901 = vmatpush1.msra.mxu0 0.0
  %1902 = vmatprep.subr.mxu0 0.0
  %1903 = vmatpush1.msra.mxu0 0.0
  %1904 = vmatprep.subr.mxu0 0.0
  %1905 = vmatpush1.msra.mxu0 0.0
  %1906 = vmatprep.subr.mxu0 0.0
  %1907 = vmatpush1.msra.mxu0 0.0
  %1908 = vmatprep.subr.mxu0 0.0
  %1909 = vmatpush1.msra.mxu0 0.0
  %1910 = vmatprep.mubr.f32.mxu0 0.0
  %1911 = vmatmul.mubr.f32.gmra.mrb[0].mxu0 %v1838
  %v1912 = vpop.f32.mrb[0].mxu0
  %v1913 = vadd.f32 0.0, %v1912
  %v1914 = vpop.f32.mrb[0].mxu0
  %1915 = vmatprep.mubr.f32.mxu0 0.0
  %1916 = vmatmul.mubr.f32.gmra.mrb[0].mxu0 %v1841
  %v1917 = vpop.f32.mrb[0].mxu0
  %v1918 = vadd.f32 0.0, %v1917
  %v1919 = vpop.f32.mrb[0].mxu0
  %1920 = vmatprep.mubr.f32.mxu0 0.0
  %1921 = vmatmul.mubr.f32.gmra.mrb[0].mxu0 %v1844
  %v1922 = vpop.f32.mrb[0].mxu0
  %v1923 = vadd.f32 0.0, %v1922
  %v1924 = vpop.f32.mrb[0].mxu0
  %1925 = vdwg.mxu0
  %v1926 = vmax.f32 %v1913, 0.0
  %v1927 = vmax.f32 %v1918, 0.0
  %v1928 = vmax.f32 %v1923, 0.0
  %v1929 = vld [vmem:[%s0 + $0x120] sm:$0xff]
  %v1930 = vld [vmem:[%s0 + $0x128] sm:$0xff]
  %v1931 = vld [vmem:[%s0 + $0x130] sm:$0xff]
  %v1932 = vld [vmem:[%s0 + $0x138] sm:$0xff]
  %v1933 = vld [vmem:[%s0 + $0x140] sm:$0xff]
  %v1934 = vld [vmem:[%s0 + $0x148] sm:$0xff]
  %v1935 = vld [vmem:[%s0 + $0x150] sm:$0xff]
  %v1936 = vld [vmem:[%s0 + $0x158] sm:$0xff]
  %v1938 = vsel %vm625, %v1926, 0
  %v1941 = vsel %vm625, %v1927, 0
  %v1944 = vsel %vm625, %v1928, 0
  %1946 = vmatprep.subr.mxu0 0.0
  %1947 = vmatpush1.msra.mxu0 %v1929
  %1948 = vmatprep.subr.mxu0 0.0
  %1949 = vmatpush1.msra.mxu0 %v1930
  %1950 = vmatprep.subr.mxu0 0.0
  %1951 = vmatpush1.msra.mxu0 %v1931
  %1952 = vmatprep.subr.mxu0 0.0
  %1953 = vmatpush1.msra.mxu0 %v1932
  %1954 = vmatprep.subr.mxu0 0.0
  %1955 = vmatpush1.msra.mxu0 %v1933
  %1956 = vmatprep.subr.mxu0 0.0
  %1957 = vmatpush1.msra.mxu0 %v1934
  %1958 = vmatprep.subr.mxu0 0.0
  %1959 = vmatpush1.msra.mxu0 %v1935
  %1960 = vmatprep.subr.mxu0 0.0
  %1961 = vmatpush1.msra.mxu0 %v1936
  %1962 = vmatprep.subr.mxu0 0.0
  %1963 = vmatpush1.msra.mxu0 0.0
  %1964 = vmatprep.subr.mxu0 0.0
  %1965 = vmatpush1.msra.mxu0 0.0
  %1966 = vmatprep.subr.mxu0 0.0
  %1967 = vmatpush1.msra.mxu0 0.0
  %1968 = vmatprep.subr.mxu0 0.0
  %1969 = vmatpush1.msra.mxu0 0.0
  %1970 = vmatprep.subr.mxu0 0.0
  %1971 = vmatpush1.msra.mxu0 0.0
  %1972 = vmatprep.subr.mxu0 0.0
  %1973 = vmatpush1.msra.mxu0 0.0
  %1974 = vmatprep.subr.mxu0 0.0
  %1975 = vmatpush1.msra.mxu0 0.0
  %1976 = vmatprep.subr.mxu0 0.0
  %1977 = vmatpush1.msra.mxu0 0.0
  %1978 = vmatprep.subr.mxu0 0.0
  %1979 = vmatpush1.msra.mxu0 0.0
  %1980 = vmatprep.subr.mxu0 0.0
  %1981 = vmatpush1.msra.mxu0 0.0
  %1982 = vmatprep.subr.mxu0 0.0
  %1983 = vmatpush1.msra.mxu0 0.0
  %1984 = vmatprep.subr.mxu0 0.0
  %1985 = vmatpush1.msra.mxu0 0.0
  %1986 = vmatprep.subr.mxu0 0.0
  %1987 = vmatpush1.msra.mxu0 0.0
  %1988 = vmatprep.subr.mxu0 0.0
  %1989 = vmatpush1.msra.mxu0 0.0
  %1990 = vmatprep.subr.mxu0 0.0
  %1991 = vmatpush1.msra.mxu0 0.0
  %1992 = vmatprep.subr.mxu0 0.0
  %1993 = vmatpush1.msra.mxu0 0.0
  %1994 = vmatprep.subr.mxu0 0.0
  %1995 = vmatpush1.msra.mxu0 0.0
  %1996 = vmatprep.subr.mxu0 0.0
  %1997 = vmatpush1.msra.mxu0 0.0
  %1998 = vmatprep.subr.mxu0 0.0
  %1999 = vmatpush1.msra.mxu0 0.0
  %2000 = vmatprep.subr.mxu0 0.0
  %2001 = vmatpush1.msra.mxu0 0.0
  %2002 = vmatprep.subr.mxu0 0.0
  %2003 = vmatpush1.msra.mxu0 0.0
  %2004 = vmatprep.subr.mxu0 0.0
  %2005 = vmatpush1.msra.mxu0 0.0
  %2006 = vmatprep.subr.mxu0 0.0
  %2007 = vmatpush1.msra.mxu0 0.0
  %2008 = vmatprep.subr.mxu0 0.0
  %2009 = vmatpush1.msra.mxu0 0.0
  %2010 = vmatprep.mubr.f32.mxu0 0.0
  %2011 = vmatmul.mubr.f32.gmra.mrb[0].mxu0 %v1938
  %v2012 = vpop.f32.mrb[0].mxu0
  %v2013 = vadd.f32 %v1830, %v2012
  %v2014 = vpop.f32.mrb[0].mxu0
  %2015 = vmatprep.mubr.f32.mxu0 0.0
  %2016 = vmatmul.mubr.f32.gmra.mrb[0].mxu0 %v1941
  %v2017 = vpop.f32.mrb[0].mxu0
  %v2018 = vadd.f32 %v1831, %v2017
  %v2019 = vpop.f32.mrb[0].mxu0
  %2020 = vmatprep.mubr.f32.mxu0 0.0
  %2021 = vmatmul.mubr.f32.gmra.mrb[0].mxu0 %v1944
  %v2022 = vpop.f32.mrb[0].mxu0
  %v2023 = vadd.f32 %v1832, %v2022
  %v2024 = vpop.f32.mrb[0].mxu0
  %2025 = vdwg.mxu0
  %v2026 = vsel %vm117, %v2013, 0.0
  %2027 = vadd.xlane.f32.xlu0 %v2026
  %v2028 = vpop.xlane.xlu0 %2027
  %v2029 = vsel %vm117, %v2018, 0.0
  %2030 = vadd.xlane.f32.xlu0 %v2029
  %v2031 = vpop.xlane.xlu0 %2030
  %v2032 = vsel %vm1217, %v2023, 0.0
  %2033 = vadd.xlane.f32.xlu0 %v2032
  %v2034 = vpop.xlane.xlu0 %2033
  %v2035 = vmul.f32 %v2028, %v495
  %v2036 = vmul.f32 %v2031, %v495
  %v2037 = vmul.f32 %v2034, %v495
  %v2038 = vsub.f32 %v2013, %v2035
  %v2039 = vsub.f32 %v2018, %v2036
  %v2040 = vsub.f32 %v2023, %v2037
  %v2041 = vmul.f32 %v2038, %v2038
  %v2042 = vmul.f32 %v2039, %v2039
  %v2043 = vmul.f32 %v2040, %v2040
  %v2044 = vsel %vm117, %v2041, 0.0
  %2045 = vadd.xlane.f32.xlu0 %v2044
  %v2046 = vpop.xlane.xlu0 %2045
  %v2047 = vsel %vm117, %v2042, 0.0
  %2048 = vadd.xlane.f32.xlu0 %v2047
  %v2049 = vpop.xlane.xlu0 %2048
  %v2050 = vsel %vm1217, %v2043, 0.0
  %2051 = vadd.xlane.f32.xlu0 %v2050
  %v2052 = vpop.xlane.xlu0 %2051
  %v2053 = vmul.f32 %v2046, %v495
  %v2054 = vmul.f32 %v2049, %v495
  %v2055 = vmul.f32 %v2052, %v495
  %v2056 = vadd.f32 %v2053, 1e-05
  %v2057 = vadd.f32 %v2054, 1e-05
  %v2058 = vadd.f32 %v2055, 1e-05
  %v2059 = vrsqrt.pop %v2056
  %v2060 = vrsqrt.pop %v2057
  %v2061 = vrsqrt.pop %v2058
  %v2062 = vmul.f32 %v2038, %v2059
  %v2063 = vmul.f32 %v2039, %v2060
  %v2064 = vmul.f32 %v2040, %v2061
  %v2065 = vld [vmem:[%s1 + $0xe8] sm:$0x1]
  %v2066 = vlaneseq
  %v2067 = vshrl.u32 %v2066, 7
  %v2068 = vsub.s32 0, %v2067
  %v2069 = vrot.slane %v2065, %v2068
  %v2070 = vmul.f32 %v2062, %v2069
  %v2071 = vmul.f32 %v2063, %v2069
  %v2072 = vmul.f32 %v2064, %v2069
  %v2073 = vld [vmem:[%s1 + $0xf0] sm:$0x1]
  %v2074 = vlaneseq
  %v2075 = vshrl.u32 %v2074, 7
  %v2076 = vsub.s32 0, %v2075
  %v2077 = vrot.slane %v2073, %v2076
  %v2078 = vadd.f32 %v2070, %v2077
  %v2079 = vadd.f32 %v2071, %v2077
  %v2080 = vadd.f32 %v2072, %v2077
  %v2081 = vld [vmem:[%s1 + $0x58] sm:$0x3]
  %v2083 = vsel %vm987, %v2081, 0
  %v2086 = vsel %vm29, %v2080, 0
  %2088 = vmatprep.subr.mxu0 0.0
  %2089 = vmatpush1.msra.mxu0 %v2078
  %2090 = vmatprep.subr.mxu0 0.0
  %2091 = vmatpush1.msra.mxu0 %v2079
  %2092 = vmatprep.subr.mxu0 0.0
  %2093 = vmatpush1.msra.mxu0 %v2086
  %2094 = vmatprep.subr.mxu0 0.0
  %2095 = vmatpush1.msra.mxu0 0.0
  %2096 = vmatprep.subr.mxu0 0.0
  %2097 = vmatpush1.msra.mxu0 0.0
  %2098 = vmatprep.subr.mxu0 0.0
  %2099 = vmatpush1.msra.mxu0 0.0
  %2100 = vmatprep.subr.mxu0 0.0
  %2101 = vmatpush1.msra.mxu0 0.0
  %2102 = vmatprep.subr.mxu0 0.0
  %2103 = vmatpush1.msra.mxu0 0.0
  %2104 = vmatprep.subr.mxu0 0.0
  %2105 = vmatpush1.msra.mxu0 0.0
  %2106 = vmatprep.subr.mxu0 0.0
  %2107 = vmatpush1.msra.mxu0 0.0
  %2108 = vmatprep.subr.mxu0 0.0
  %2109 = vmatpush1.msra.mxu0 0.0
  %2110 = vmatprep.subr.mxu0 0.0
  %2111 = vmatpush1.msra.mxu0 0.0
  %2112 = vmatprep.subr.mxu0 0.0
  %2113 = vmatpush1.msra.mxu0 0.0
  %2114 = vmatprep.subr.mxu0 0.0
  %2115 = vmatpush1.msra.mxu0 0.0
  %2116 = vmatprep.subr.mxu0 0.0
  %2117 = vmatpush1.msra.mxu0 0.0
  %2118 = vmatprep.subr.mxu0 0.0
  %2119 = vmatpush1.msra.mxu0 0.0
  %2120 = vmatprep.subr.mxu0 0.0
  %2121 = vmatpush1.msra.mxu0 0.0
  %2122 = vmatprep.subr.mxu0 0.0
  %2123 = vmatpush1.msra.mxu0 0.0
  %2124 = vmatprep.subr.mxu0 0.0
  %2125 = vmatpush1.msra.mxu0 0.0
  %2126 = vmatprep.subr.mxu0 0.0
  %2127 = vmatpush1.msra.mxu0 0.0
  %2128 = vmatprep.subr.mxu0 0.0
  %2129 = vmatpush1.msra.mxu0 0.0
  %2130 = vmatprep.subr.mxu0 0.0
  %2131 = vmatpush1.msra.mxu0 0.0
  %2132 = vmatprep.subr.mxu0 0.0
  %2133 = vmatpush1.msra.mxu0 0.0
  %2134 = vmatprep.subr.mxu0 0.0
  %2135 = vmatpush1.msra.mxu0 0.0
  %2136 = vmatprep.subr.mxu0 0.0
  %2137 = vmatpush1.msra.mxu0 0.0
  %2138 = vmatprep.subr.mxu0 0.0
  %2139 = vmatpush1.msra.mxu0 0.0
  %2140 = vmatprep.subr.mxu0 0.0
  %2141 = vmatpush1.msra.mxu0 0.0
  %2142 = vmatprep.subr.mxu0 0.0
  %2143 = vmatpush1.msra.mxu0 0.0
  %2144 = vmatprep.subr.mxu0 0.0
  %2145 = vmatpush1.msra.mxu0 0.0
  %2146 = vmatprep.subr.mxu0 0.0
  %2147 = vmatpush1.msra.mxu0 0.0
  %2148 = vmatprep.subr.mxu0 0.0
  %2149 = vmatpush1.msra.mxu0 0.0
  %2150 = vmatprep.subr.mxu0 0.0
  %2151 = vmatpush1.msra.mxu0 0.0
  %2152 = vmatprep.mubr.f32.mxu0 0.0
  %2153 = vmatmul.mubr.f32.gmra.mrb[0].mxu0 %v2083
  %v2154 = vpop.f32.mrb[0].mxu0
  %v2155 = vadd.f32 0.0, %v2154
  %v2156 = vpop.f32.mrb[0].mxu0
  %2157 = vdwg.mxu0
  %v2158 = vld [vmem:[%s1 + $0x50] sm:$0x1]
  %v2159 = vlaneseq
  %v2160 = vshrl.u32 %v2159, 7
  %v2161 = vsub.s32 0, %v2160
  %v2162 = vrot.slane %v2158, %v2161
  %v2163 = vmul.f32 %v2155, %v2162
  %vm2164 = vcmask 254976
  %v2165 = vsel %vm2164, %v2163, 0.0
  %2166 = vadd.xlane.f32.xlu0 %v2165
  %v2167 = vpop.xlane.xlu0 %2166
  %v2168 = vld [vmem:[%s1 + $0x60] sm:$0x1]
  %v2169 = vlaneseq
  %v2170 = vshrl.u32 %v2169, 7
  %v2171 = vsub.s32 0, %v2170
  %v2172 = vrot.slane %v2168, %v2171
  %v2173 = vadd.f32 %v2167, %v2172
  %vm2174 = vcmask 1024
  %2175 = vst.msk [vmem:[%s4] sm:$0x3] %vm2174, %v2173
  // Predicated region
  $region18: #{transformer_forward.1} parent=0 // pred_check
    _
  $region19: #{transformer_forward.1} parent=0 // pred_check_branch
    %2177 = sbr.rel (0) target = $region21
  $region20: #{transformer_forward.1} parent=0 // pred_region
    _
  $region21: #{transformer_forward.1} parent=0 // pred_fallthru
    _
  // Predicated region
  $region22: #{transformer_forward.1} parent=0 // pred_check
    _
  $region23: #{transformer_forward.1} parent=0 // pred_check_branch
    %2179 = sbr.rel (0) target = $region25
  $region24: #{transformer_forward.1} parent=0 // pred_region
    _
  $region25: #{transformer_forward.1} parent=0 // pred_fallthru
    _

</llo_original>
